<compile_context>
chip_gen: v7x
topology: tpu7x:2x2x1
jax: 0.10.0
libtpu: 0.0.40
codegen_flags: <defaults>
</compile_context>

<pallas_src>
import functools

import jax
import jax.numpy as jnp
from jax import lax
from jax.experimental import pallas as pl
from jax.experimental.pallas import tpu as pltpu


def _vmem_spec():
    return pl.BlockSpec(memory_space=pltpu.MemorySpace.VMEM)


def _smem_spec():
    return pl.BlockSpec(memory_space=pltpu.MemorySpace.SMEM)


# ----------------------------------------------------------------------------
# fused SL-GAD forward kernel
# ----------------------------------------------------------------------------
def _slgad_kernel(scal_ref, x_ref, adj_ref, we_ref, be_ref, wd_ref, bd_ref,
                  w1_ref, w2_ref, out_ref, *, B, S, Fin, Fout):
    """Layout: one row per (view, subgraph); a subgraph's S node feature
    vectors are concatenated along lanes, node 0 (the anchor) first.
    Views stack along rows: [x1 | x2 | r1 | r2] -> 4B rows.
    adj_ref[g, i*S + j] = edge weight src j -> dst i inside subgraph g."""
    G4 = 4 * B
    G2 = 2 * B

    # scalars (SMEM): [enc_prelu, dec_prelu, disc1_bias, disc2_bias, alpha, beta]
    p_enc = scal_ref[0]
    p_dec = scal_ref[1]
    b1 = scal_ref[2]
    b2 = scal_ref[3]
    alpha = scal_ref[4]
    beta = scal_ref[5]

    x = x_ref[...]                     # (4B, S*Fin) f32, un-zeroed features
    adj = adj_ref[...]                 # (4B, S*S)   f32
    be_cat = be_ref[...]               # (1, S*Fout) f32  (bias tiled per node group)
    bd_cat = bd_ref[...]               # (1, S*Fin)  f32
    be = be_cat[:, 0:Fout]             # (1, Fout)

    # ---- encoder Linear: per-node W via block-diagonal weight (one MXU matmul) ----
    xw = jnp.dot(x.astype(jnp.bfloat16), we_ref[...],
                 preferred_element_type=jnp.float32)           # (4B, S*Fout) f32

    # anchor embeddings for views 0,1 (from un-zeroed anchor features) + bias + PReLU
    anc12 = xw[0:G2, 0:Fout] + be
    anc12 = jnp.where(anc12 >= 0.0, anc12, p_enc * anc12)
    anc_1 = anc12[0:B, :]
    anc_2 = anc12[B:G2, :]

    # zero the anchor-node lane group for the conv path (in_feat[::S] = 0)
    col = lax.broadcasted_iota(jnp.int32, (G4, S * Fout), 1)
    xw_z = jnp.where(col >= Fout, xw, 0.0)

    # ---- GraphConv(norm='none', edge-weighted): block SpMV as S*S broadcast MACs ----
    def block_spmv(coef, feats, F):
        # coef: (G, S*S); feats: (G, S*F); out group i = sum_j coef[:, i*S+j] * group_j
        groups = []
        for i in range(S):
            acc = None
            for j in range(S):
                k = i * S + j
                term = coef[:, k:k + 1] * feats[:, j * F:(j + 1) * F]
                acc = term if acc is None else acc + term
            groups.append(acc)
        return jnp.concatenate(groups, axis=1)

    h = block_spmv(adj, xw_z, Fout) + be_cat
    h = jnp.where(h >= 0.0, h, p_enc * h)                      # (4B, S*Fout)

    # ---- subgraph average pooling (views 0,1 only): S lane-group adds ----
    h12 = h[0:G2, :]
    pool = h12[:, 0:Fout]
    for i in range(1, S):
        pool = pool + h12[:, i * Fout:(i + 1) * Fout]
    pool = pool * (1.0 / S)                                    # (2B, Fout)
    pool_1 = pool[0:B, :]
    pool_2 = pool[B:G2, :]

    # ---- decoder GCN on views 2,3 (reconstruction path) ----
    hr = h[G2:G4, :]                                           # (2B, S*Fout)
    xwd = jnp.dot(hr.astype(jnp.bfloat16), wd_ref[...],
                  preferred_element_type=jnp.float32)          # (2B, S*Fin)
    hd = block_spmv(adj[G2:G4, :], xwd, Fin) + bd_cat
    hd = jnp.where(hd >= 0.0, hd, p_dec * hd)                  # (2B, S*Fin)

    dec_anc = hd[:, 0:Fin]                                     # (2B, Fin)
    raw_anchor = x[G2:G2 + B, 0:Fin]                           # r1 anchors (B, Fin) f32
    diff1 = dec_anc[0:B, :] - raw_anchor
    diff2 = dec_anc[B:G2, :] - raw_anchor

    # ---- bilinear discriminators (anchor @ W reused for pos and neg pairs) ----
    t1 = jnp.dot(anc_2.astype(jnp.bfloat16), w1_ref[...],
                 preferred_element_type=jnp.float32)           # (B, Fout)
    t2 = jnp.dot(anc_1.astype(jnp.bfloat16), w2_ref[...],
                 preferred_element_type=jnp.float32)
    # negative pairs: pools rolled by one subgraph.  The SpMV no longer needs
    # any row shifts, so this single tiny (B, Fout) sublane shuffle stays a
    # concatenate (shift-sign-safe vs. the reference).
    neg_1 = jnp.concatenate([pool_1[B - 1:B, :], pool_1[:B - 1, :]], axis=0)
    neg_2 = jnp.concatenate([pool_2[B - 1:B, :], pool_2[:B - 1, :]], axis=0)
    ps1 = jnp.sum(t1 * pool_1, axis=-1, keepdims=True) + b1    # (B, 1)
    ps2 = jnp.sum(t2 * pool_2, axis=-1, keepdims=True) + b2
    ns1 = jnp.sum(t1 * neg_1, axis=-1, keepdims=True) + b1
    ns2 = jnp.sum(t2 * neg_2, axis=-1, keepdims=True) + b2

    # ---- losses ----
    score_pos = 0.5 * (ps1 + ps2)                              # raw logits
    score_neg = 0.5 * (ns1 + ns2)
    # BCEWithLogits(reduction='none'), labels 1 for pos / 0 for neg, then mean.
    loss_pos = -jax.nn.log_sigmoid(score_pos)
    loss_neg = -jax.nn.log_sigmoid(-score_neg)
    contrastive_loss = (jnp.sum(loss_pos, keepdims=True) +
                        jnp.sum(loss_neg, keepdims=True)) / (2.0 * B)    # (1, 1)
    generative_loss = 0.5 * (jnp.mean(jnp.square(diff1), keepdims=True) +
                             jnp.mean(jnp.square(diff2), keepdims=True))
    total_loss = alpha * contrastive_loss + beta * generative_loss

    # ---- anomaly score (sklearn-style min-max scaling, single feature) ----
    contrastive_score = jax.nn.sigmoid(score_neg) - jax.nn.sigmoid(score_pos)
    gen_score = 0.5 * (jnp.sqrt(jnp.sum(jnp.square(diff1), axis=-1, keepdims=True)) +
                       jnp.sqrt(jnp.sum(jnp.square(diff2), axis=-1, keepdims=True)))

    def minmax(v):
        mn = jnp.min(v, keepdims=True)
        rng = jnp.max(v, keepdims=True) - mn
        rng = jnp.where(rng == 0.0, 1.0, rng)
        return (v - mn) / rng

    total_score = alpha * minmax(contrastive_score) + beta * minmax(gen_score)  # (B, 1)

    # ---- single packed output: [score | total_loss | contrastive | generative] ----
    # TODO(synk): at production B make this lane-dense ((4, B) / 128-lane padded)
    # to avoid the masked store on the 4-wide axis.
    ones_col = jnp.ones((B, 1), jnp.float32)
    out_ref[...] = jnp.concatenate(
        [total_score,
         ones_col * total_loss,
         ones_col * contrastive_loss,
         ones_col * generative_loss], axis=1)


# ----------------------------------------------------------------------------
# wrapper glue (pure layout plumbing, runs under the same jit as the kernel)
# ----------------------------------------------------------------------------
def sl_gad_forward(params, adj_1, adj_2, pos_in_feat, neg_in_feat,
                   alpha=1.0, beta=0.6, subgraph_size=4):
    """adj_1 / adj_2: (B, S, S) per-subgraph dense adjacency blocks with
    A[b, dst, src] = edge weight (GraphConv norm='none', edge weighted).
    pos_in_feat = [x1, x2, r1, r2]; node b*S is the anchor of subgraph b."""
    x1, x2, r1, r2 = pos_in_feat
    del neg_in_feat        # anchor_out_neg is cloned by the reference but never used
    n, fin = x1.shape
    S = subgraph_size
    assert n % S == 0
    B = n // S
    fout = params["enc_w_t"].shape[1]

    # subgraph-major, node-within-subgraph-along-lanes layout (wrapper-side reshape)
    def to_cat(v):
        return v.reshape(B, S * fin).astype(jnp.float32)

    x_cat = jnp.concatenate([to_cat(x1), to_cat(x2), to_cat(r1), to_cat(r2)], axis=0)
    a2 = jnp.concatenate([adj_1.reshape(B, S * S), adj_2.reshape(B, S * S)], axis=0)
    adj = jnp.concatenate([a2, a2], axis=0).astype(jnp.float32)          # (4B, S*S)

    # block-diagonal per-node weights so one MXU matmul applies W to every node group
    eye = jnp.eye(S, dtype=jnp.float32)
    we_blk = jnp.kron(eye, params["enc_w_t"]).astype(jnp.bfloat16)       # (S*Fin, S*Fout)
    wd_blk = jnp.kron(eye, params["dec_w_t"]).astype(jnp.bfloat16)       # (S*Fout, S*Fin)
    be_cat = jnp.tile(params["enc_b"].reshape(1, -1), (1, S)).astype(jnp.float32)
    bd_cat = jnp.tile(params["dec_b"].reshape(1, -1), (1, S)).astype(jnp.float32)

    scal = jnp.stack([
        params["enc_prelu"].astype(jnp.float32),
        params["dec_prelu"].astype(jnp.float32),
        params["d1_b"].reshape(()).astype(jnp.float32),
        params["d2_b"].reshape(()).astype(jnp.float32),
        jnp.asarray(alpha, jnp.float32),
        jnp.asarray(beta, jnp.float32),
    ])

    out = pl.pallas_call(
        functools.partial(_slgad_kernel, B=B, S=S, Fin=fin, Fout=fout),
        out_shape=jax.ShapeDtypeStruct((B, 4), jnp.float32),
        in_specs=[_smem_spec()] + [_vmem_spec()] * 8,
        out_specs=_vmem_spec(),
    )(scal, x_cat, adj, we_blk, be_cat, wd_blk, bd_cat,
      params["d1_w"].astype(jnp.bfloat16), params["d2_w"].astype(jnp.bfloat16))

    total_score = out[:, 0:1]
    total_loss = out[0, 1]
    contrastive_loss = out[0, 2]
    generative_loss = out[0, 3]
    return total_loss, total_score, contrastive_loss, generative_loss


# ----------------------------------------------------------------------------
# deterministic parameter init (matches the module's shapes / init scheme)
# ----------------------------------------------------------------------------
def init_params(key, in_feats, out_feats):
    ks = jax.random.split(key, 4)

    def xavier(k, fan_in, fan_out, shape):
        bound = (6.0 / (fan_in + fan_out)) ** 0.5
        return jax.random.uniform(k, shape, jnp.float32, -bound, bound)

    enc_w = xavier(ks[0], in_feats, out_feats, (out_feats, in_feats))   # nn.Linear(in, out)
    dec_w = xavier(ks[1], out_feats, in_feats, (in_feats, out_feats))   # nn.Linear(out, in)
    d1_w = xavier(ks[2], out_feats * out_feats, out_feats, (1, out_feats, out_feats))
    d2_w = xavier(ks[3], out_feats * out_feats, out_feats, (1, out_feats, out_feats))
    return dict(
        enc_w_t=enc_w.T, enc_b=jnp.zeros((out_feats,), jnp.float32),
        enc_prelu=jnp.asarray(0.25, jnp.float32),
        dec_w_t=dec_w.T, dec_b=jnp.zeros((in_feats,), jnp.float32),
        dec_prelu=jnp.asarray(0.25, jnp.float32),
        d1_w=d1_w[0], d1_b=jnp.zeros((1,), jnp.float32),
        d2_w=d2_w[0], d2_b=jnp.zeros((1,), jnp.float32),
    )


if __name__ == "__main__":
    in_feats, out_feats = 32, 16
    B, S = 4, 4                # 4 subgraphs of 4 nodes each (anchor = node 0 of each)
    N = B * S

    key = jax.random.PRNGKey(0)
    keys = jax.random.split(key, 9)
    params = init_params(keys[0], in_feats, out_feats)

    pos_in_feat_1 = jax.random.normal(keys[1], (N, in_feats), jnp.float32)
    pos_in_feat_2 = jax.random.normal(keys[2], (N, in_feats), jnp.float32)
    raw_pos_in_feat_1 = jax.random.normal(keys[3], (N, in_feats), jnp.float32)
    raw_pos_in_feat_2 = jax.random.normal(keys[4], (N, in_feats), jnp.float32)
    neg_in_feat = jax.random.normal(keys[5], (N, in_feats), jnp.float32)

    # two batched subgraph sets as per-subgraph weighted adjacency blocks
    adj_1 = jax.random.uniform(keys[6], (B, S, S), jnp.float32, 0.1, 1.0)
    adj_2 = jax.random.uniform(keys[7], (B, S, S), jnp.float32, 0.1, 1.0)

    fwd = jax.jit(sl_gad_forward,
                  static_argnames=("alpha", "beta", "subgraph_size"))

    total_loss, total_score, contrastive_loss, generative_loss = fwd(
        params, adj_1, adj_2,
        [pos_in_feat_1, pos_in_feat_2, raw_pos_in_feat_1, raw_pos_in_feat_2],
        neg_in_feat)

    jax.block_until_ready((total_loss, total_score, contrastive_loss, generative_loss))
    assert total_score.shape == (B, 1)
    assert bool(jnp.isfinite(total_loss)) and bool(jnp.all(jnp.isfinite(total_score)))
    print("KERNEL_OK")
</pallas_src>

<mosaic_0001>
module attributes {stable_mosaic.version = 11 : i64} {
  func.func @_slgad_kernel(%arg0: memref<6xf32, #tpu.memory_space<smem>>, %arg1: memref<16x128xf32, #tpu.memory_space<vmem>>, %arg2: memref<16x16xf32, #tpu.memory_space<vmem>>, %arg3: memref<128x64xbf16, #tpu.memory_space<vmem>>, %arg4: memref<1x64xf32, #tpu.memory_space<vmem>>, %arg5: memref<64x128xbf16, #tpu.memory_space<vmem>>, %arg6: memref<1x128xf32, #tpu.memory_space<vmem>>, %arg7: memref<16x16xbf16, #tpu.memory_space<vmem>>, %arg8: memref<16x16xbf16, #tpu.memory_space<vmem>>, %arg9: memref<4x4xf32, #tpu.memory_space<vmem>>) attributes {dimension_semantics = [], scalar_prefetch = 0 : i64, scratch_operands = 0 : i64, tpu.core_type = #tpu.core_type<tc>} {
    %c0 = arith.constant 0 : index
    %0 = memref.load %arg0[%c0] : memref<6xf32, #tpu.memory_space<smem>>
    %c1 = arith.constant 1 : index
    %1 = memref.load %arg0[%c1] : memref<6xf32, #tpu.memory_space<smem>>
    %c2 = arith.constant 2 : index
    %2 = memref.load %arg0[%c2] : memref<6xf32, #tpu.memory_space<smem>>
    %c3 = arith.constant 3 : index
    %3 = memref.load %arg0[%c3] : memref<6xf32, #tpu.memory_space<smem>>
    %c4 = arith.constant 4 : index
    %4 = memref.load %arg0[%c4] : memref<6xf32, #tpu.memory_space<smem>>
    %c5 = arith.constant 5 : index
    %5 = memref.load %arg0[%c5] : memref<6xf32, #tpu.memory_space<smem>>
    %c0_0 = arith.constant 0 : index
    %c0_1 = arith.constant 0 : index
    %6 = vector.load %arg1[%c0_0, %c0_1] : memref<16x128xf32, #tpu.memory_space<vmem>>, vector<16x128xf32>
    %c0_2 = arith.constant 0 : index
    %c0_3 = arith.constant 0 : index
    %7 = vector.load %arg2[%c0_2, %c0_3] : memref<16x16xf32, #tpu.memory_space<vmem>>, vector<16x16xf32>
    %c0_4 = arith.constant 0 : index
    %c0_5 = arith.constant 0 : index
    %8 = vector.load %arg4[%c0_4, %c0_5] : memref<1x64xf32, #tpu.memory_space<vmem>>, vector<1x64xf32>
    %c0_6 = arith.constant 0 : index
    %c0_7 = arith.constant 0 : index
    %9 = vector.load %arg6[%c0_6, %c0_7] : memref<1x128xf32, #tpu.memory_space<vmem>>, vector<1x128xf32>
    %10 = vector.extract_strided_slice %8 {offsets = [0, 0], sizes = [1, 16], strides = [1, 1]} : vector<1x64xf32> to vector<1x16xf32>
    %11 = arith.truncf %6 : vector<16x128xf32> to vector<16x128xbf16>
    %c0_8 = arith.constant 0 : index
    %c0_9 = arith.constant 0 : index
    %12 = vector.load %arg3[%c0_8, %c0_9] : memref<128x64xbf16, #tpu.memory_space<vmem>>, vector<128x64xbf16>
    %cst = arith.constant dense<0.000000e+00> : vector<16x64xf32>
    %13 = tpu.matmul %11, %12, %cst {dimension_numbers = #tpu.dot_dimension_numbers<[1], [0], [0], [1], [0, 0, 1, 1], [], []>} : vector<16x128xbf16>, vector<128x64xbf16>, vector<16x64xf32> -> vector<16x64xf32>
    %14 = vector.extract_strided_slice %13 {offsets = [0, 0], sizes = [8, 16], strides = [1, 1]} : vector<16x64xf32> to vector<8x16xf32>
    %15 = vector.broadcast %10 : vector<1x16xf32> to vector<8x16xf32>
    %16 = arith.addf %14, %15 : vector<8x16xf32>
    %cst_10 = arith.constant 0.000000e+00 : f32
    %17 = vector.broadcast %cst_10 : f32 to vector<8x16xf32>
    %18 = arith.cmpf oge, %16, %17 : vector<8x16xf32>
    %19 = vector.broadcast %0 : f32 to vector<8x16xf32>
    %20 = arith.mulf %19, %16 : vector<8x16xf32>
    %21 = arith.select %18, %16, %20 : vector<8x16xi1>, vector<8x16xf32>
    %22 = vector.extract_strided_slice %21 {offsets = [0, 0], sizes = [4, 16], strides = [1, 1]} : vector<8x16xf32> to vector<4x16xf32>
    %23 = vector.extract_strided_slice %21 {offsets = [4, 0], sizes = [4, 16], strides = [1, 1]} : vector<8x16xf32> to vector<4x16xf32>
    %24 = tpu.iota {dimensions = array<i32: 1>} : vector<16x64xi32>
    %c16_i32 = arith.constant 16 : i32
    %25 = vector.broadcast %c16_i32 : i32 to vector<16x64xi32>
    %26 = arith.cmpi sge, %24, %25 : vector<16x64xi32>
    %cst_11 = arith.constant 0.000000e+00 : f32
    %27 = vector.broadcast %cst_11 : f32 to vector<16x64xf32>
    %28 = arith.select %26, %13, %27 : vector<16x64xi1>, vector<16x64xf32>
    %29 = vector.extract_strided_slice %7 {offsets = [0, 0], sizes = [16, 1], strides = [1, 1]} : vector<16x16xf32> to vector<16x1xf32>
    %30 = vector.extract_strided_slice %28 {offsets = [0, 0], sizes = [16, 16], strides = [1, 1]} : vector<16x64xf32> to vector<16x16xf32>
    %31 = vector.broadcast %29 : vector<16x1xf32> to vector<16x16xf32>
    %32 = arith.mulf %31, %30 : vector<16x16xf32>
    %33 = vector.extract_strided_slice %7 {offsets = [0, 1], sizes = [16, 1], strides = [1, 1]} : vector<16x16xf32> to vector<16x1xf32>
    %34 = vector.extract_strided_slice %28 {offsets = [0, 16], sizes = [16, 16], strides = [1, 1]} : vector<16x64xf32> to vector<16x16xf32>
    %35 = vector.broadcast %33 : vector<16x1xf32> to vector<16x16xf32>
    %36 = arith.mulf %35, %34 : vector<16x16xf32>
    %37 = arith.addf %32, %36 : vector<16x16xf32>
    %38 = vector.extract_strided_slice %7 {offsets = [0, 2], sizes = [16, 1], strides = [1, 1]} : vector<16x16xf32> to vector<16x1xf32>
    %39 = vector.extract_strided_slice %28 {offsets = [0, 32], sizes = [16, 16], strides = [1, 1]} : vector<16x64xf32> to vector<16x16xf32>
    %40 = vector.broadcast %38 : vector<16x1xf32> to vector<16x16xf32>
    %41 = arith.mulf %40, %39 : vector<16x16xf32>
    %42 = arith.addf %37, %41 : vector<16x16xf32>
    %43 = vector.extract_strided_slice %7 {offsets = [0, 3], sizes = [16, 1], strides = [1, 1]} : vector<16x16xf32> to vector<16x1xf32>
    %44 = vector.extract_strided_slice %28 {offsets = [0, 48], sizes = [16, 16], strides = [1, 1]} : vector<16x64xf32> to vector<16x16xf32>
    %45 = vector.broadcast %43 : vector<16x1xf32> to vector<16x16xf32>
    %46 = arith.mulf %45, %44 : vector<16x16xf32>
    %47 = arith.addf %42, %46 : vector<16x16xf32>
    %48 = vector.extract_strided_slice %7 {offsets = [0, 4], sizes = [16, 1], strides = [1, 1]} : vector<16x16xf32> to vector<16x1xf32>
    %49 = vector.extract_strided_slice %28 {offsets = [0, 0], sizes = [16, 16], strides = [1, 1]} : vector<16x64xf32> to vector<16x16xf32>
    %50 = vector.broadcast %48 : vector<16x1xf32> to vector<16x16xf32>
    %51 = arith.mulf %50, %49 : vector<16x16xf32>
    %52 = vector.extract_strided_slice %7 {offsets = [0, 5], sizes = [16, 1], strides = [1, 1]} : vector<16x16xf32> to vector<16x1xf32>
    %53 = vector.extract_strided_slice %28 {offsets = [0, 16], sizes = [16, 16], strides = [1, 1]} : vector<16x64xf32> to vector<16x16xf32>
    %54 = vector.broadcast %52 : vector<16x1xf32> to vector<16x16xf32>
    %55 = arith.mulf %54, %53 : vector<16x16xf32>
    %56 = arith.addf %51, %55 : vector<16x16xf32>
    %57 = vector.extract_strided_slice %7 {offsets = [0, 6], sizes = [16, 1], strides = [1, 1]} : vector<16x16xf32> to vector<16x1xf32>
    %58 = vector.extract_strided_slice %28 {offsets = [0, 32], sizes = [16, 16], strides = [1, 1]} : vector<16x64xf32> to vector<16x16xf32>
    %59 = vector.broadcast %57 : vector<16x1xf32> to vector<16x16xf32>
    %60 = arith.mulf %59, %58 : vector<16x16xf32>
    %61 = arith.addf %56, %60 : vector<16x16xf32>
    %62 = vector.extract_strided_slice %7 {offsets = [0, 7], sizes = [16, 1], strides = [1, 1]} : vector<16x16xf32> to vector<16x1xf32>
    %63 = vector.extract_strided_slice %28 {offsets = [0, 48], sizes = [16, 16], strides = [1, 1]} : vector<16x64xf32> to vector<16x16xf32>
    %64 = vector.broadcast %62 : vector<16x1xf32> to vector<16x16xf32>
    %65 = arith.mulf %64, %63 : vector<16x16xf32>
    %66 = arith.addf %61, %65 : vector<16x16xf32>
    %67 = vector.extract_strided_slice %7 {offsets = [0, 8], sizes = [16, 1], strides = [1, 1]} : vector<16x16xf32> to vector<16x1xf32>
    %68 = vector.extract_strided_slice %28 {offsets = [0, 0], sizes = [16, 16], strides = [1, 1]} : vector<16x64xf32> to vector<16x16xf32>
    %69 = vector.broadcast %67 : vector<16x1xf32> to vector<16x16xf32>
    %70 = arith.mulf %69, %68 : vector<16x16xf32>
    %71 = vector.extract_strided_slice %7 {offsets = [0, 9], sizes = [16, 1], strides = [1, 1]} : vector<16x16xf32> to vector<16x1xf32>
    %72 = vector.extract_strided_slice %28 {offsets = [0, 16], sizes = [16, 16], strides = [1, 1]} : vector<16x64xf32> to vector<16x16xf32>
    %73 = vector.broadcast %71 : vector<16x1xf32> to vector<16x16xf32>
    %74 = arith.mulf %73, %72 : vector<16x16xf32>
    %75 = arith.addf %70, %74 : vector<16x16xf32>
    %76 = vector.extract_strided_slice %7 {offsets = [0, 10], sizes = [16, 1], strides = [1, 1]} : vector<16x16xf32> to vector<16x1xf32>
    %77 = vector.extract_strided_slice %28 {offsets = [0, 32], sizes = [16, 16], strides = [1, 1]} : vector<16x64xf32> to vector<16x16xf32>
    %78 = vector.broadcast %76 : vector<16x1xf32> to vector<16x16xf32>
    %79 = arith.mulf %78, %77 : vector<16x16xf32>
    %80 = arith.addf %75, %79 : vector<16x16xf32>
    %81 = vector.extract_strided_slice %7 {offsets = [0, 11], sizes = [16, 1], strides = [1, 1]} : vector<16x16xf32> to vector<16x1xf32>
    %82 = vector.extract_strided_slice %28 {offsets = [0, 48], sizes = [16, 16], strides = [1, 1]} : vector<16x64xf32> to vector<16x16xf32>
    %83 = vector.broadcast %81 : vector<16x1xf32> to vector<16x16xf32>
    %84 = arith.mulf %83, %82 : vector<16x16xf32>
    %85 = arith.addf %80, %84 : vector<16x16xf32>
    %86 = vector.extract_strided_slice %7 {offsets = [0, 12], sizes = [16, 1], strides = [1, 1]} : vector<16x16xf32> to vector<16x1xf32>
    %87 = vector.extract_strided_slice %28 {offsets = [0, 0], sizes = [16, 16], strides = [1, 1]} : vector<16x64xf32> to vector<16x16xf32>
    %88 = vector.broadcast %86 : vector<16x1xf32> to vector<16x16xf32>
    %89 = arith.mulf %88, %87 : vector<16x16xf32>
    %90 = vector.extract_strided_slice %7 {offsets = [0, 13], sizes = [16, 1], strides = [1, 1]} : vector<16x16xf32> to vector<16x1xf32>
    %91 = vector.extract_strided_slice %28 {offsets = [0, 16], sizes = [16, 16], strides = [1, 1]} : vector<16x64xf32> to vector<16x16xf32>
    %92 = vector.broadcast %90 : vector<16x1xf32> to vector<16x16xf32>
    %93 = arith.mulf %92, %91 : vector<16x16xf32>
    %94 = arith.addf %89, %93 : vector<16x16xf32>
    %95 = vector.extract_strided_slice %7 {offsets = [0, 14], sizes = [16, 1], strides = [1, 1]} : vector<16x16xf32> to vector<16x1xf32>
    %96 = vector.extract_strided_slice %28 {offsets = [0, 32], sizes = [16, 16], strides = [1, 1]} : vector<16x64xf32> to vector<16x16xf32>
    %97 = vector.broadcast %95 : vector<16x1xf32> to vector<16x16xf32>
    %98 = arith.mulf %97, %96 : vector<16x16xf32>
    %99 = arith.addf %94, %98 : vector<16x16xf32>
    %100 = vector.extract_strided_slice %7 {offsets = [0, 15], sizes = [16, 1], strides = [1, 1]} : vector<16x16xf32> to vector<16x1xf32>
    %101 = vector.extract_strided_slice %28 {offsets = [0, 48], sizes = [16, 16], strides = [1, 1]} : vector<16x64xf32> to vector<16x16xf32>
    %102 = vector.broadcast %100 : vector<16x1xf32> to vector<16x16xf32>
    %103 = arith.mulf %102, %101 : vector<16x16xf32>
    %104 = arith.addf %99, %103 : vector<16x16xf32>
    %105 = tpu.concatenate %47, %66, %85, %104 in 1 : vector<16x16xf32>, vector<16x16xf32>, vector<16x16xf32>, vector<16x16xf32> -> vector<16x64xf32>
    %106 = vector.broadcast %8 : vector<1x64xf32> to vector<16x64xf32>
    %107 = arith.addf %105, %106 : vector<16x64xf32>
    %cst_12 = arith.constant 0.000000e+00 : f32
    %108 = vector.broadcast %cst_12 : f32 to vector<16x64xf32>
    %109 = arith.cmpf oge, %107, %108 : vector<16x64xf32>
    %110 = vector.broadcast %0 : f32 to vector<16x64xf32>
    %111 = arith.mulf %110, %107 : vector<16x64xf32>
    %112 = arith.select %109, %107, %111 : vector<16x64xi1>, vector<16x64xf32>
    %113 = vector.extract_strided_slice %112 {offsets = [0, 0], sizes = [8, 64], strides = [1, 1]} : vector<16x64xf32> to vector<8x64xf32>
    %114 = vector.extract_strided_slice %113 {offsets = [0, 0], sizes = [8, 16], strides = [1, 1]} : vector<8x64xf32> to vector<8x16xf32>
    %115 = vector.extract_strided_slice %113 {offsets = [0, 16], sizes = [8, 16], strides = [1, 1]} : vector<8x64xf32> to vector<8x16xf32>
    %116 = arith.addf %114, %115 : vector<8x16xf32>
    %117 = vector.extract_strided_slice %113 {offsets = [0, 32], sizes = [8, 16], strides = [1, 1]} : vector<8x64xf32> to vector<8x16xf32>
    %118 = arith.addf %116, %117 : vector<8x16xf32>
    %119 = vector.extract_strided_slice %113 {offsets = [0, 48], sizes = [8, 16], strides = [1, 1]} : vector<8x64xf32> to vector<8x16xf32>
    %120 = arith.addf %118, %119 : vector<8x16xf32>
    %cst_13 = arith.constant 2.500000e-01 : f32
    %121 = vector.broadcast %cst_13 : f32 to vector<8x16xf32>
    %122 = arith.mulf %120, %121 : vector<8x16xf32>
    %123 = vector.extract_strided_slice %122 {offsets = [0, 0], sizes = [4, 16], strides = [1, 1]} : vector<8x16xf32> to vector<4x16xf32>
    %124 = vector.extract_strided_slice %122 {offsets = [4, 0], sizes = [4, 16], strides = [1, 1]} : vector<8x16xf32> to vector<4x16xf32>
    %125 = vector.extract_strided_slice %112 {offsets = [8, 0], sizes = [8, 64], strides = [1, 1]} : vector<16x64xf32> to vector<8x64xf32>
    %126 = arith.truncf %125 : vector<8x64xf32> to vector<8x64xbf16>
    %c0_14 = arith.constant 0 : index
    %c0_15 = arith.constant 0 : index
    %127 = vector.load %arg5[%c0_14, %c0_15] : memref<64x128xbf16, #tpu.memory_space<vmem>>, vector<64x128xbf16>
    %cst_16 = arith.constant dense<0.000000e+00> : vector<8x128xf32>
    %128 = tpu.matmul %126, %127, %cst_16 {dimension_numbers = #tpu.dot_dimension_numbers<[1], [0], [0], [1], [0, 0, 1, 1], [], []>} : vector<8x64xbf16>, vector<64x128xbf16>, vector<8x128xf32> -> vector<8x128xf32>
    %129 = vector.extract_strided_slice %7 {offsets = [8, 0], sizes = [8, 16], strides = [1, 1]} : vector<16x16xf32> to vector<8x16xf32>
    %130 = vector.extract_strided_slice %129 {offsets = [0, 0], sizes = [8, 1], strides = [1, 1]} : vector<8x16xf32> to vector<8x1xf32>
    %131 = vector.extract_strided_slice %128 {offsets = [0, 0], sizes = [8, 32], strides = [1, 1]} : vector<8x128xf32> to vector<8x32xf32>
    %132 = vector.broadcast %130 : vector<8x1xf32> to vector<8x32xf32>
    %133 = arith.mulf %132, %131 : vector<8x32xf32>
    %134 = vector.extract_strided_slice %129 {offsets = [0, 1], sizes = [8, 1], strides = [1, 1]} : vector<8x16xf32> to vector<8x1xf32>
    %135 = vector.extract_strided_slice %128 {offsets = [0, 32], sizes = [8, 32], strides = [1, 1]} : vector<8x128xf32> to vector<8x32xf32>
    %136 = vector.broadcast %134 : vector<8x1xf32> to vector<8x32xf32>
    %137 = arith.mulf %136, %135 : vector<8x32xf32>
    %138 = arith.addf %133, %137 : vector<8x32xf32>
    %139 = vector.extract_strided_slice %129 {offsets = [0, 2], sizes = [8, 1], strides = [1, 1]} : vector<8x16xf32> to vector<8x1xf32>
    %140 = vector.extract_strided_slice %128 {offsets = [0, 64], sizes = [8, 32], strides = [1, 1]} : vector<8x128xf32> to vector<8x32xf32>
    %141 = vector.broadcast %139 : vector<8x1xf32> to vector<8x32xf32>
    %142 = arith.mulf %141, %140 : vector<8x32xf32>
    %143 = arith.addf %138, %142 : vector<8x32xf32>
    %144 = vector.extract_strided_slice %129 {offsets = [0, 3], sizes = [8, 1], strides = [1, 1]} : vector<8x16xf32> to vector<8x1xf32>
    %145 = vector.extract_strided_slice %128 {offsets = [0, 96], sizes = [8, 32], strides = [1, 1]} : vector<8x128xf32> to vector<8x32xf32>
    %146 = vector.broadcast %144 : vector<8x1xf32> to vector<8x32xf32>
    %147 = arith.mulf %146, %145 : vector<8x32xf32>
    %148 = arith.addf %143, %147 : vector<8x32xf32>
    %149 = vector.extract_strided_slice %129 {offsets = [0, 4], sizes = [8, 1], strides = [1, 1]} : vector<8x16xf32> to vector<8x1xf32>
    %150 = vector.extract_strided_slice %128 {offsets = [0, 0], sizes = [8, 32], strides = [1, 1]} : vector<8x128xf32> to vector<8x32xf32>
    %151 = vector.broadcast %149 : vector<8x1xf32> to vector<8x32xf32>
    %152 = arith.mulf %151, %150 : vector<8x32xf32>
    %153 = vector.extract_strided_slice %129 {offsets = [0, 5], sizes = [8, 1], strides = [1, 1]} : vector<8x16xf32> to vector<8x1xf32>
    %154 = vector.extract_strided_slice %128 {offsets = [0, 32], sizes = [8, 32], strides = [1, 1]} : vector<8x128xf32> to vector<8x32xf32>
    %155 = vector.broadcast %153 : vector<8x1xf32> to vector<8x32xf32>
    %156 = arith.mulf %155, %154 : vector<8x32xf32>
    %157 = arith.addf %152, %156 : vector<8x32xf32>
    %158 = vector.extract_strided_slice %129 {offsets = [0, 6], sizes = [8, 1], strides = [1, 1]} : vector<8x16xf32> to vector<8x1xf32>
    %159 = vector.extract_strided_slice %128 {offsets = [0, 64], sizes = [8, 32], strides = [1, 1]} : vector<8x128xf32> to vector<8x32xf32>
    %160 = vector.broadcast %158 : vector<8x1xf32> to vector<8x32xf32>
    %161 = arith.mulf %160, %159 : vector<8x32xf32>
    %162 = arith.addf %157, %161 : vector<8x32xf32>
    %163 = vector.extract_strided_slice %129 {offsets = [0, 7], sizes = [8, 1], strides = [1, 1]} : vector<8x16xf32> to vector<8x1xf32>
    %164 = vector.extract_strided_slice %128 {offsets = [0, 96], sizes = [8, 32], strides = [1, 1]} : vector<8x128xf32> to vector<8x32xf32>
    %165 = vector.broadcast %163 : vector<8x1xf32> to vector<8x32xf32>
    %166 = arith.mulf %165, %164 : vector<8x32xf32>
    %167 = arith.addf %162, %166 : vector<8x32xf32>
    %168 = vector.extract_strided_slice %129 {offsets = [0, 8], sizes = [8, 1], strides = [1, 1]} : vector<8x16xf32> to vector<8x1xf32>
    %169 = vector.extract_strided_slice %128 {offsets = [0, 0], sizes = [8, 32], strides = [1, 1]} : vector<8x128xf32> to vector<8x32xf32>
    %170 = vector.broadcast %168 : vector<8x1xf32> to vector<8x32xf32>
    %171 = arith.mulf %170, %169 : vector<8x32xf32>
    %172 = vector.extract_strided_slice %129 {offsets = [0, 9], sizes = [8, 1], strides = [1, 1]} : vector<8x16xf32> to vector<8x1xf32>
    %173 = vector.extract_strided_slice %128 {offsets = [0, 32], sizes = [8, 32], strides = [1, 1]} : vector<8x128xf32> to vector<8x32xf32>
    %174 = vector.broadcast %172 : vector<8x1xf32> to vector<8x32xf32>
    %175 = arith.mulf %174, %173 : vector<8x32xf32>
    %176 = arith.addf %171, %175 : vector<8x32xf32>
    %177 = vector.extract_strided_slice %129 {offsets = [0, 10], sizes = [8, 1], strides = [1, 1]} : vector<8x16xf32> to vector<8x1xf32>
    %178 = vector.extract_strided_slice %128 {offsets = [0, 64], sizes = [8, 32], strides = [1, 1]} : vector<8x128xf32> to vector<8x32xf32>
    %179 = vector.broadcast %177 : vector<8x1xf32> to vector<8x32xf32>
    %180 = arith.mulf %179, %178 : vector<8x32xf32>
    %181 = arith.addf %176, %180 : vector<8x32xf32>
    %182 = vector.extract_strided_slice %129 {offsets = [0, 11], sizes = [8, 1], strides = [1, 1]} : vector<8x16xf32> to vector<8x1xf32>
    %183 = vector.extract_strided_slice %128 {offsets = [0, 96], sizes = [8, 32], strides = [1, 1]} : vector<8x128xf32> to vector<8x32xf32>
    %184 = vector.broadcast %182 : vector<8x1xf32> to vector<8x32xf32>
    %185 = arith.mulf %184, %183 : vector<8x32xf32>
    %186 = arith.addf %181, %185 : vector<8x32xf32>
    %187 = vector.extract_strided_slice %129 {offsets = [0, 12], sizes = [8, 1], strides = [1, 1]} : vector<8x16xf32> to vector<8x1xf32>
    %188 = vector.extract_strided_slice %128 {offsets = [0, 0], sizes = [8, 32], strides = [1, 1]} : vector<8x128xf32> to vector<8x32xf32>
    %189 = vector.broadcast %187 : vector<8x1xf32> to vector<8x32xf32>
    %190 = arith.mulf %189, %188 : vector<8x32xf32>
    %191 = vector.extract_strided_slice %129 {offsets = [0, 13], sizes = [8, 1], strides = [1, 1]} : vector<8x16xf32> to vector<8x1xf32>
    %192 = vector.extract_strided_slice %128 {offsets = [0, 32], sizes = [8, 32], strides = [1, 1]} : vector<8x128xf32> to vector<8x32xf32>
    %193 = vector.broadcast %191 : vector<8x1xf32> to vector<8x32xf32>
    %194 = arith.mulf %193, %192 : vector<8x32xf32>
    %195 = arith.addf %190, %194 : vector<8x32xf32>
    %196 = vector.extract_strided_slice %129 {offsets = [0, 14], sizes = [8, 1], strides = [1, 1]} : vector<8x16xf32> to vector<8x1xf32>
    %197 = vector.extract_strided_slice %128 {offsets = [0, 64], sizes = [8, 32], strides = [1, 1]} : vector<8x128xf32> to vector<8x32xf32>
    %198 = vector.broadcast %196 : vector<8x1xf32> to vector<8x32xf32>
    %199 = arith.mulf %198, %197 : vector<8x32xf32>
    %200 = arith.addf %195, %199 : vector<8x32xf32>
    %201 = vector.extract_strided_slice %129 {offsets = [0, 15], sizes = [8, 1], strides = [1, 1]} : vector<8x16xf32> to vector<8x1xf32>
    %202 = vector.extract_strided_slice %128 {offsets = [0, 96], sizes = [8, 32], strides = [1, 1]} : vector<8x128xf32> to vector<8x32xf32>
    %203 = vector.broadcast %201 : vector<8x1xf32> to vector<8x32xf32>
    %204 = arith.mulf %203, %202 : vector<8x32xf32>
    %205 = arith.addf %200, %204 : vector<8x32xf32>
    %206 = tpu.concatenate %148, %167, %186, %205 in 1 : vector<8x32xf32>, vector<8x32xf32>, vector<8x32xf32>, vector<8x32xf32> -> vector<8x128xf32>
    %207 = vector.broadcast %9 : vector<1x128xf32> to vector<8x128xf32>
    %208 = arith.addf %206, %207 : vector<8x128xf32>
    %cst_17 = arith.constant 0.000000e+00 : f32
    %209 = vector.broadcast %cst_17 : f32 to vector<8x128xf32>
    %210 = arith.cmpf oge, %208, %209 : vector<8x128xf32>
    %211 = vector.broadcast %1 : f32 to vector<8x128xf32>
    %212 = arith.mulf %211, %208 : vector<8x128xf32>
    %213 = arith.select %210, %208, %212 : vector<8x128xi1>, vector<8x128xf32>
    %214 = vector.extract_strided_slice %213 {offsets = [0, 0], sizes = [8, 32], strides = [1, 1]} : vector<8x128xf32> to vector<8x32xf32>
    %215 = vector.extract_strided_slice %6 {offsets = [8, 0], sizes = [4, 32], strides = [1, 1]} : vector<16x128xf32> to vector<4x32xf32>
    %216 = vector.extract_strided_slice %214 {offsets = [0, 0], sizes = [4, 32], strides = [1, 1]} : vector<8x32xf32> to vector<4x32xf32>
    %217 = arith.subf %216, %215 : vector<4x32xf32>
    %218 = vector.extract_strided_slice %214 {offsets = [4, 0], sizes = [4, 32], strides = [1, 1]} : vector<8x32xf32> to vector<4x32xf32>
    %219 = arith.subf %218, %215 : vector<4x32xf32>
    %220 = arith.truncf %23 : vector<4x16xf32> to vector<4x16xbf16>
    %c0_18 = arith.constant 0 : index
    %c0_19 = arith.constant 0 : index
    %221 = vector.load %arg7[%c0_18, %c0_19] : memref<16x16xbf16, #tpu.memory_space<vmem>>, vector<16x16xbf16>
    %cst_20 = arith.constant dense<0.000000e+00> : vector<4x16xf32>
    %222 = tpu.matmul %220, %221, %cst_20 {dimension_numbers = #tpu.dot_dimension_numbers<[1], [0], [0], [1], [0, 0, 1, 1], [], []>} : vector<4x16xbf16>, vector<16x16xbf16>, vector<4x16xf32> -> vector<4x16xf32>
    %223 = arith.truncf %22 : vector<4x16xf32> to vector<4x16xbf16>
    %c0_21 = arith.constant 0 : index
    %c0_22 = arith.constant 0 : index
    %224 = vector.load %arg8[%c0_21, %c0_22] : memref<16x16xbf16, #tpu.memory_space<vmem>>, vector<16x16xbf16>
    %cst_23 = arith.constant dense<0.000000e+00> : vector<4x16xf32>
    %225 = tpu.matmul %223, %224, %cst_23 {dimension_numbers = #tpu.dot_dimension_numbers<[1], [0], [0], [1], [0, 0, 1, 1], [], []>} : vector<4x16xbf16>, vector<16x16xbf16>, vector<4x16xf32> -> vector<4x16xf32>
    %226 = vector.extract_strided_slice %123 {offsets = [3, 0], sizes = [1, 16], strides = [1, 1]} : vector<4x16xf32> to vector<1x16xf32>
    %227 = vector.extract_strided_slice %123 {offsets = [0, 0], sizes = [3, 16], strides = [1, 1]} : vector<4x16xf32> to vector<3x16xf32>
    %228 = tpu.concatenate %226, %227 in 0 : vector<1x16xf32>, vector<3x16xf32> -> vector<4x16xf32>
    %229 = vector.extract_strided_slice %124 {offsets = [3, 0], sizes = [1, 16], strides = [1, 1]} : vector<4x16xf32> to vector<1x16xf32>
    %230 = vector.extract_strided_slice %124 {offsets = [0, 0], sizes = [3, 16], strides = [1, 1]} : vector<4x16xf32> to vector<3x16xf32>
    %231 = tpu.concatenate %229, %230 in 0 : vector<1x16xf32>, vector<3x16xf32> -> vector<4x16xf32>
    %232 = arith.mulf %222, %123 : vector<4x16xf32>
    %cst_24 = arith.constant dense<0.000000e+00> : vector<4xf32>
    %233 = vector.multi_reduction <add>, %232, %cst_24 [1] : vector<4x16xf32> to vector<4xf32>
    %234 = vector.shape_cast %233 : vector<4xf32> to vector<4x1xf32>
    %235 = vector.broadcast %2 : f32 to vector<4x1xf32>
    %236 = arith.addf %234, %235 : vector<4x1xf32>
    %237 = arith.mulf %225, %124 : vector<4x16xf32>
    %cst_25 = arith.constant dense<0.000000e+00> : vector<4xf32>
    %238 = vector.multi_reduction <add>, %237, %cst_25 [1] : vector<4x16xf32> to vector<4xf32>
    %239 = vector.shape_cast %238 : vector<4xf32> to vector<4x1xf32>
    %240 = vector.broadcast %3 : f32 to vector<4x1xf32>
    %241 = arith.addf %239, %240 : vector<4x1xf32>
    %242 = arith.mulf %222, %228 : vector<4x16xf32>
    %cst_26 = arith.constant dense<0.000000e+00> : vector<4xf32>
    %243 = vector.multi_reduction <add>, %242, %cst_26 [1] : vector<4x16xf32> to vector<4xf32>
    %244 = vector.shape_cast %243 : vector<4xf32> to vector<4x1xf32>
    %245 = vector.broadcast %2 : f32 to vector<4x1xf32>
    %246 = arith.addf %244, %245 : vector<4x1xf32>
    %247 = arith.mulf %225, %231 : vector<4x16xf32>
    %cst_27 = arith.constant dense<0.000000e+00> : vector<4xf32>
    %248 = vector.multi_reduction <add>, %247, %cst_27 [1] : vector<4x16xf32> to vector<4xf32>
    %249 = vector.shape_cast %248 : vector<4xf32> to vector<4x1xf32>
    %250 = vector.broadcast %3 : f32 to vector<4x1xf32>
    %251 = arith.addf %249, %250 : vector<4x1xf32>
    %252 = arith.addf %236, %241 : vector<4x1xf32>
    %cst_28 = arith.constant 5.000000e-01 : f32
    %253 = vector.broadcast %cst_28 : f32 to vector<4x1xf32>
    %254 = arith.mulf %253, %252 : vector<4x1xf32>
    %255 = arith.addf %246, %251 : vector<4x1xf32>
    %cst_29 = arith.constant 5.000000e-01 : f32
    %256 = vector.broadcast %cst_29 : f32 to vector<4x1xf32>
    %257 = arith.mulf %256, %255 : vector<4x1xf32>
    %cst_30 = arith.constant 0.000000e+00 : f32
    %258 = vector.broadcast %cst_30 : f32 to vector<4x1xf32>
    %259 = arith.subf %258, %254 : vector<4x1xf32>
    %cst_31 = arith.constant 0.000000e+00 : f32
    %260 = vector.broadcast %cst_31 : f32 to vector<4x1xf32>
    %261 = arith.maximumf %259, %260 : vector<4x1xf32>
    %262 = vector.broadcast %cst_31 : f32 to vector<4x1xf32>
    %263 = arith.subf %259, %262 : vector<4x1xf32>
    %264 = arith.cmpf one, %263, %263 : vector<4x1xf32>
    %265 = vector.broadcast %cst_31 : f32 to vector<4x1xf32>
    %266 = arith.addf %259, %265 : vector<4x1xf32>
    %267 = math.absf %263 : vector<4x1xf32>
    %cst_32 = arith.constant 0.000000e+00 : f32
    %268 = vector.broadcast %cst_32 : f32 to vector<4x1xf32>
    %269 = arith.subf %268, %267 : vector<4x1xf32>
    %270 = math.exp %269 : vector<4x1xf32>
    %271 = math.log1p %270 : vector<4x1xf32>
    %272 = arith.addf %261, %271 : vector<4x1xf32>
    %273 = arith.select %264, %266, %272 : vector<4x1xi1>, vector<4x1xf32>
    %cst_33 = arith.constant 0.000000e+00 : f32
    %274 = vector.broadcast %cst_33 : f32 to vector<4x1xf32>
    %275 = arith.subf %274, %273 : vector<4x1xf32>
    %cst_34 = arith.constant 0.000000e+00 : f32
    %276 = vector.broadcast %cst_34 : f32 to vector<4x1xf32>
    %277 = arith.subf %276, %275 : vector<4x1xf32>
    %cst_35 = arith.constant 0.000000e+00 : f32
    %278 = vector.broadcast %cst_35 : f32 to vector<4x1xf32>
    %279 = arith.subf %278, %257 : vector<4x1xf32>
    %cst_36 = arith.constant 0.000000e+00 : f32
    %280 = vector.broadcast %cst_36 : f32 to vector<4x1xf32>
    %281 = arith.subf %280, %279 : vector<4x1xf32>
    %cst_37 = arith.constant 0.000000e+00 : f32
    %282 = vector.broadcast %cst_37 : f32 to vector<4x1xf32>
    %283 = arith.maximumf %281, %282 : vector<4x1xf32>
    %284 = vector.broadcast %cst_37 : f32 to vector<4x1xf32>
    %285 = arith.subf %281, %284 : vector<4x1xf32>
    %286 = arith.cmpf one, %285, %285 : vector<4x1xf32>
    %287 = vector.broadcast %cst_37 : f32 to vector<4x1xf32>
    %288 = arith.addf %281, %287 : vector<4x1xf32>
    %289 = math.absf %285 : vector<4x1xf32>
    %cst_38 = arith.constant 0.000000e+00 : f32
    %290 = vector.broadcast %cst_38 : f32 to vector<4x1xf32>
    %291 = arith.subf %290, %289 : vector<4x1xf32>
    %292 = math.exp %291 : vector<4x1xf32>
    %293 = math.log1p %292 : vector<4x1xf32>
    %294 = arith.addf %283, %293 : vector<4x1xf32>
    %295 = arith.select %286, %288, %294 : vector<4x1xi1>, vector<4x1xf32>
    %cst_39 = arith.constant 0.000000e+00 : f32
    %296 = vector.broadcast %cst_39 : f32 to vector<4x1xf32>
    %297 = arith.subf %296, %295 : vector<4x1xf32>
    %cst_40 = arith.constant 0.000000e+00 : f32
    %298 = vector.broadcast %cst_40 : f32 to vector<4x1xf32>
    %299 = arith.subf %298, %297 : vector<4x1xf32>
    %300 = vector.shape_cast %277 : vector<4x1xf32> to vector<1x4x1xf32>
    %cst_41 = arith.constant dense<0.000000e+00> : vector<1xf32>
    %301 = vector.multi_reduction <add>, %300, %cst_41 [1, 2] : vector<1x4x1xf32> to vector<1xf32>
    %302 = vector.shape_cast %301 : vector<1xf32> to vector<1x1x1xf32>
    %303 = vector.extract %302[0, 0, 0] : f32 from vector<1x1x1xf32>
    %304 = vector.broadcast %303 : f32 to vector<1x1xf32>
    %305 = vector.shape_cast %299 : vector<4x1xf32> to vector<1x4x1xf32>
    %cst_42 = arith.constant dense<0.000000e+00> : vector<1xf32>
    %306 = vector.multi_reduction <add>, %305, %cst_42 [1, 2] : vector<1x4x1xf32> to vector<1xf32>
    %307 = vector.shape_cast %306 : vector<1xf32> to vector<1x1x1xf32>
    %308 = vector.extract %307[0, 0, 0] : f32 from vector<1x1x1xf32>
    %309 = vector.broadcast %308 : f32 to vector<1x1xf32>
    %310 = arith.addf %304, %309 : vector<1x1xf32>
    %cst_43 = arith.constant 8.000000e+00 : f32
    %311 = vector.broadcast %cst_43 : f32 to vector<1x1xf32>
    %312 = arith.divf %310, %311 : vector<1x1xf32>
    %313 = arith.mulf %217, %217 : vector<4x32xf32>
    %314 = vector.shape_cast %313 : vector<4x32xf32> to vector<1x4x32xf32>
    %cst_44 = arith.constant dense<0.000000e+00> : vector<1xf32>
    %315 = vector.multi_reduction <add>, %314, %cst_44 [1, 2] : vector<1x4x32xf32> to vector<1xf32>
    %316 = vector.shape_cast %315 : vector<1xf32> to vector<1x1x1xf32>
    %317 = vector.extract %316[0, 0, 0] : f32 from vector<1x1x1xf32>
    %318 = vector.broadcast %317 : f32 to vector<1x1xf32>
    %cst_45 = arith.constant 1.280000e+02 : f32
    %319 = vector.broadcast %cst_45 : f32 to vector<1x1xf32>
    %320 = arith.divf %318, %319 : vector<1x1xf32>
    %321 = arith.mulf %219, %219 : vector<4x32xf32>
    %322 = vector.shape_cast %321 : vector<4x32xf32> to vector<1x4x32xf32>
    %cst_46 = arith.constant dense<0.000000e+00> : vector<1xf32>
    %323 = vector.multi_reduction <add>, %322, %cst_46 [1, 2] : vector<1x4x32xf32> to vector<1xf32>
    %324 = vector.shape_cast %323 : vector<1xf32> to vector<1x1x1xf32>
    %325 = vector.extract %324[0, 0, 0] : f32 from vector<1x1x1xf32>
    %326 = vector.broadcast %325 : f32 to vector<1x1xf32>
    %cst_47 = arith.constant 1.280000e+02 : f32
    %327 = vector.broadcast %cst_47 : f32 to vector<1x1xf32>
    %328 = arith.divf %326, %327 : vector<1x1xf32>
    %329 = arith.addf %320, %328 : vector<1x1xf32>
    %cst_48 = arith.constant 5.000000e-01 : f32
    %330 = vector.broadcast %cst_48 : f32 to vector<1x1xf32>
    %331 = arith.mulf %330, %329 : vector<1x1xf32>
    %332 = vector.broadcast %4 : f32 to vector<1x1xf32>
    %333 = arith.mulf %332, %312 : vector<1x1xf32>
    %334 = vector.broadcast %5 : f32 to vector<1x1xf32>
    %335 = arith.mulf %334, %331 : vector<1x1xf32>
    %336 = arith.addf %333, %335 : vector<1x1xf32>
    %337 = arith.negf %257 : vector<4x1xf32>
    %338 = math.exp %337 : vector<4x1xf32>
    %cst_49 = arith.constant 1.000000e+00 : f32
    %339 = vector.broadcast %cst_49 : f32 to vector<4x1xf32>
    %340 = arith.addf %339, %338 : vector<4x1xf32>
    %341 = arith.divf %339, %340 : vector<4x1xf32>
    %342 = arith.negf %254 : vector<4x1xf32>
    %343 = math.exp %342 : vector<4x1xf32>
    %cst_50 = arith.constant 1.000000e+00 : f32
    %344 = vector.broadcast %cst_50 : f32 to vector<4x1xf32>
    %345 = arith.addf %344, %343 : vector<4x1xf32>
    %346 = arith.divf %344, %345 : vector<4x1xf32>
    %347 = arith.subf %341, %346 : vector<4x1xf32>
    %348 = arith.mulf %217, %217 : vector<4x32xf32>
    %cst_51 = arith.constant dense<0.000000e+00> : vector<4xf32>
    %349 = vector.multi_reduction <add>, %348, %cst_51 [1] : vector<4x32xf32> to vector<4xf32>
    %350 = vector.shape_cast %349 : vector<4xf32> to vector<4x1xf32>
    %351 = math.sqrt %350 : vector<4x1xf32>
    %352 = arith.mulf %219, %219 : vector<4x32xf32>
    %cst_52 = arith.constant dense<0.000000e+00> : vector<4xf32>
    %353 = vector.multi_reduction <add>, %352, %cst_52 [1] : vector<4x32xf32> to vector<4xf32>
    %354 = vector.shape_cast %353 : vector<4xf32> to vector<4x1xf32>
    %355 = math.sqrt %354 : vector<4x1xf32>
    %356 = arith.addf %351, %355 : vector<4x1xf32>
    %cst_53 = arith.constant 5.000000e-01 : f32
    %357 = vector.broadcast %cst_53 : f32 to vector<4x1xf32>
    %358 = arith.mulf %357, %356 : vector<4x1xf32>
    %359 = vector.shape_cast %347 : vector<4x1xf32> to vector<1x4x1xf32>
    %cst_54 = arith.constant dense<0x7F800000> : vector<1xf32>
    %360 = vector.multi_reduction <minimumf>, %359, %cst_54 [1, 2] : vector<1x4x1xf32> to vector<1xf32>
    %361 = vector.shape_cast %360 : vector<1xf32> to vector<1x1x1xf32>
    %362 = vector.extract %361[0, 0, 0] : f32 from vector<1x1x1xf32>
    %363 = vector.broadcast %362 : f32 to vector<1x1xf32>
    %364 = vector.shape_cast %347 : vector<4x1xf32> to vector<1x4x1xf32>
    %cst_55 = arith.constant dense<0xFF800000> : vector<1xf32>
    %365 = vector.multi_reduction <maximumf>, %364, %cst_55 [1, 2] : vector<1x4x1xf32> to vector<1xf32>
    %366 = vector.shape_cast %365 : vector<1xf32> to vector<1x1x1xf32>
    %367 = vector.extract %366[0, 0, 0] : f32 from vector<1x1x1xf32>
    %368 = vector.broadcast %367 : f32 to vector<1x1xf32>
    %369 = arith.subf %368, %363 : vector<1x1xf32>
    %cst_56 = arith.constant 0.000000e+00 : f32
    %370 = vector.broadcast %cst_56 : f32 to vector<1x1xf32>
    %371 = arith.cmpf oeq, %369, %370 : vector<1x1xf32>
    %cst_57 = arith.constant 1.000000e+00 : f32
    %372 = vector.broadcast %cst_57 : f32 to vector<1x1xf32>
    %373 = arith.select %371, %372, %369 : vector<1x1xi1>, vector<1x1xf32>
    %374 = vector.broadcast %363 : vector<1x1xf32> to vector<4x1xf32>
    %375 = arith.subf %347, %374 : vector<4x1xf32>
    %376 = vector.broadcast %373 : vector<1x1xf32> to vector<4x1xf32>
    %377 = arith.divf %375, %376 : vector<4x1xf32>
    %378 = vector.broadcast %4 : f32 to vector<4x1xf32>
    %379 = arith.mulf %378, %377 : vector<4x1xf32>
    %380 = vector.shape_cast %358 : vector<4x1xf32> to vector<1x4x1xf32>
    %cst_58 = arith.constant dense<0x7F800000> : vector<1xf32>
    %381 = vector.multi_reduction <minimumf>, %380, %cst_58 [1, 2] : vector<1x4x1xf32> to vector<1xf32>
    %382 = vector.shape_cast %381 : vector<1xf32> to vector<1x1x1xf32>
    %383 = vector.extract %382[0, 0, 0] : f32 from vector<1x1x1xf32>
    %384 = vector.broadcast %383 : f32 to vector<1x1xf32>
    %385 = vector.shape_cast %358 : vector<4x1xf32> to vector<1x4x1xf32>
    %cst_59 = arith.constant dense<0xFF800000> : vector<1xf32>
    %386 = vector.multi_reduction <maximumf>, %385, %cst_59 [1, 2] : vector<1x4x1xf32> to vector<1xf32>
    %387 = vector.shape_cast %386 : vector<1xf32> to vector<1x1x1xf32>
    %388 = vector.extract %387[0, 0, 0] : f32 from vector<1x1x1xf32>
    %389 = vector.broadcast %388 : f32 to vector<1x1xf32>
    %390 = arith.subf %389, %384 : vector<1x1xf32>
    %cst_60 = arith.constant 0.000000e+00 : f32
    %391 = vector.broadcast %cst_60 : f32 to vector<1x1xf32>
    %392 = arith.cmpf oeq, %390, %391 : vector<1x1xf32>
    %cst_61 = arith.constant 1.000000e+00 : f32
    %393 = vector.broadcast %cst_61 : f32 to vector<1x1xf32>
    %394 = arith.select %392, %393, %390 : vector<1x1xi1>, vector<1x1xf32>
    %395 = vector.broadcast %384 : vector<1x1xf32> to vector<4x1xf32>
    %396 = arith.subf %358, %395 : vector<4x1xf32>
    %397 = vector.broadcast %394 : vector<1x1xf32> to vector<4x1xf32>
    %398 = arith.divf %396, %397 : vector<4x1xf32>
    %399 = vector.broadcast %5 : f32 to vector<4x1xf32>
    %400 = arith.mulf %399, %398 : vector<4x1xf32>
    %401 = arith.addf %379, %400 : vector<4x1xf32>
    %cst_62 = arith.constant 1.000000e+00 : f32
    %402 = vector.broadcast %cst_62 : f32 to vector<4x1xf32>
    %403 = vector.broadcast %336 : vector<1x1xf32> to vector<4x1xf32>
    %404 = arith.mulf %402, %403 : vector<4x1xf32>
    %405 = vector.broadcast %312 : vector<1x1xf32> to vector<4x1xf32>
    %406 = arith.mulf %402, %405 : vector<4x1xf32>
    %407 = vector.broadcast %331 : vector<1x1xf32> to vector<4x1xf32>
    %408 = arith.mulf %402, %407 : vector<4x1xf32>
    %409 = tpu.concatenate %401, %404, %406, %408 in 1 : vector<4x1xf32>, vector<4x1xf32>, vector<4x1xf32>, vector<4x1xf32> -> vector<4x4xf32>
    %c0_63 = arith.constant 0 : index
    %c0_64 = arith.constant 0 : index
    %410 = vector.load %arg9[%c0_63, %c0_64] : memref<4x4xf32, #tpu.memory_space<vmem>>, vector<4x4xf32>
    tpu.vector_store %arg9[%c0_63, %c0_64], %409 {strides = array<i32>} : memref<4x4xf32, #tpu.memory_space<vmem>>, vector<4x4xf32>,
    return
  }
}

</mosaic_0001>

<llo_original>
// kernel: sl_gad_forward.1
$region0: #{sl_gad_forward.1}
  #allocation0 [shape = 'u32[]', space=smem, size = 0x4, offset = 0x4, fixed_abs, tag = 'smem constant byte address 0x4 - core index']
  #allocation1 [shape = 'u32[144,128]{1,0:T(1,128)}', space=vmem, size = 0x12000, scoped, tag = 'internal scratch']
  %s0 = inlined_call_operand.vmem [shape: f32[6], index: 0, kind: input, shape index: {}]
  %s1 = inlined_call_operand.vmem [shape: f32[16,128], index: 1, kind: input, shape index: {}]
  %s2 = inlined_call_operand.vmem [shape: f32[16,16], index: 2, kind: input, shape index: {}]
  %s3 = inlined_call_operand.vmem [shape: bf16[128,64], index: 3, kind: input, shape index: {}]
  %s4 = inlined_call_operand.vmem [shape: f32[1,64], index: 4, kind: input, shape index: {}]
  %s5 = inlined_call_operand.vmem [shape: bf16[64,128], index: 5, kind: input, shape index: {}]
  %s6 = inlined_call_operand.vmem [shape: f32[1,128], index: 6, kind: input, shape index: {}]
  %s7 = inlined_call_operand.vmem [shape: bf16[16,16], index: 7, kind: input, shape index: {}]
  %s8 = inlined_call_operand.vmem [shape: bf16[16,16], index: 8, kind: input, shape index: {}]
  %s9 = inlined_call_operand.vmem [shape: f32[4,4], index: 9, kind: output, shape index: {}]
  %s10 = sld [smem:[#allocation0]]
  $region50: #{sl_gad_forward.1} parent=0
    _
  %s12 = ssub.s32 1, %s10
  %s13 = scalar_select 0, %s12, %s10
  $region1: #{sl_gad_forward.1} parent=0
    #allocation2 [shape = 'u8[512]{0}', space=smem, size = 0x200, scoped, tag = 'input window, operand 0, single buffered']
    #allocation3 [shape = 's32[1]{0}', space=sflag, size = 0x4, scoped, tag = 'scoped memory for sl_gad_forward.1']
    %14 = vsyncpa [#allocation3], 0
    // Predicated region
    $region2: #{sl_gad_forward.1} parent=1 // pred_check
      _
    $region3: #{sl_gad_forward.1} parent=1 // pred_check_branch
      %16 = sbr.rel (0) target = $region5
    $region4: #{sl_gad_forward.1} parent=1 // pred_region
      %s18 = ssub.s32 16, 16
      %19 = vsyncadd [#allocation3], %s18
      %s21 = sshll.u32 %s0, 4
      %s22 = int_to_ptr.vmem [resolvable:$true] %s21
      %24 = dma.vmem_to_smem %s22, 16, [#allocation2], [#allocation3]
    $region5: #{sl_gad_forward.1} parent=1 // pred_fallthru
      _
    // Predicated region
    $region6: #{sl_gad_forward.1} parent=1 // pred_check
      _
    $region7: #{sl_gad_forward.1} parent=1 // pred_check_branch
      %26 = sbr.rel (0) target = $region9
    $region8: #{sl_gad_forward.1} parent=1 // pred_region
      _
    $region9: #{sl_gad_forward.1} parent=1 // pred_fallthru
      _
    // Predicated region
    $region10: #{sl_gad_forward.1} parent=1 // pred_check
      _
    $region11: #{sl_gad_forward.1} parent=1 // pred_check_branch
      %28 = sbr.rel (0) target = $region13
    $region12: #{sl_gad_forward.1} parent=1 // pred_region
      _
    $region13: #{sl_gad_forward.1} parent=1 // pred_fallthru
      _
    // Predicated region
    $region14: #{sl_gad_forward.1} parent=1 // pred_check
      _
    $region15: #{sl_gad_forward.1} parent=1 // pred_check_branch
      %30 = sbr.rel (0) target = $region17
    $region16: #{sl_gad_forward.1} parent=1 // pred_region
      _
    $region17: #{sl_gad_forward.1} parent=1 // pred_fallthru
      _
    // Predicated region
    $region18: #{sl_gad_forward.1} parent=1 // pred_check
      _
    $region19: #{sl_gad_forward.1} parent=1 // pred_check_branch
      %32 = sbr.rel (0) target = $region21
    $region20: #{sl_gad_forward.1} parent=1 // pred_region
      _
    $region21: #{sl_gad_forward.1} parent=1 // pred_fallthru
      _
    // Predicated region
    $region22: #{sl_gad_forward.1} parent=1 // pred_check
      _
    $region23: #{sl_gad_forward.1} parent=1 // pred_check_branch
      %34 = sbr.rel (0) target = $region25
    $region24: #{sl_gad_forward.1} parent=1 // pred_region
      _
    $region25: #{sl_gad_forward.1} parent=1 // pred_fallthru
      _
    // Predicated region
    $region26: #{sl_gad_forward.1} parent=1 // pred_check
      _
    $region27: #{sl_gad_forward.1} parent=1 // pred_check_branch
      %36 = sbr.rel (0) target = $region29
    $region28: #{sl_gad_forward.1} parent=1 // pred_region
      _
    $region29: #{sl_gad_forward.1} parent=1 // pred_fallthru
      _
    // Predicated region
    $region30: #{sl_gad_forward.1} parent=1 // pred_check
      _
    $region31: #{sl_gad_forward.1} parent=1 // pred_check_branch
      %38 = sbr.rel (0) target = $region33
    $region32: #{sl_gad_forward.1} parent=1 // pred_region
      _
    $region33: #{sl_gad_forward.1} parent=1 // pred_fallthru
      _
    // Predicated region
    $region34: #{sl_gad_forward.1} parent=1 // pred_check
      _
    $region35: #{sl_gad_forward.1} parent=1 // pred_check_branch
      %40 = sbr.rel (0) target = $region37
    $region36: #{sl_gad_forward.1} parent=1 // pred_region
      _
    $region37: #{sl_gad_forward.1} parent=1 // pred_fallthru
      _
    // Predicated region
    $region38: #{sl_gad_forward.1} parent=1 // pred_check
      _
    $region39: #{sl_gad_forward.1} parent=1 // pred_check_branch
      %42 = sbr.rel (0) target = $region41
    $region40: #{sl_gad_forward.1} parent=1 // pred_region
      %43 = dma.done [#allocation3], 16
    $region41: #{sl_gad_forward.1} parent=1 // pred_fallthru
      _
    %44 = sfence
    %s46 = sld [smem:[#allocation2]]
    %s47 = sld [smem:[#allocation2 + $0x1]]
    %s48 = sld [smem:[#allocation2 + $0x2]]
    %s49 = sld [smem:[#allocation2 + $0x3]]
    %s50 = sld [smem:[#allocation2 + $0x4]]
    %s51 = sld [smem:[#allocation2 + $0x5]]
    %v52 = vld [vmem:[%s1] sm:$0xff]
    %v53 = vld [vmem:[%s1 + $0x8] sm:$0xff]
    %v54 = vld [vmem:[%s2] sm:$0xff]
    %v55 = vld [vmem:[%s2 + $0x8] sm:$0xff]
    %v56 = vld [vmem:[%s4] sm:$0x1]
    %v57 = vld [vmem:[%s6] sm:$0x1]
    %v58 = vpack.c.bf16 %v53, %v52
    %v59 = vld [vmem:[%s3] sm:$0xf]
    %v60 = vld [vmem:[%s3 + $0x4] sm:$0xf]
    %v61 = vld [vmem:[%s3 + $0x8] sm:$0xf]
    %v62 = vld [vmem:[%s3 + $0xc] sm:$0xf]
    %v63 = vld [vmem:[%s3 + $0x10] sm:$0xf]
    %v64 = vld [vmem:[%s3 + $0x14] sm:$0xf]
    %v65 = vld [vmem:[%s3 + $0x18] sm:$0xf]
    %v66 = vld [vmem:[%s3 + $0x1c] sm:$0xf]
    %v67 = vld [vmem:[%s3 + $0x20] sm:$0xf]
    %v68 = vld [vmem:[%s3 + $0x24] sm:$0xf]
    %v69 = vld [vmem:[%s3 + $0x28] sm:$0xf]
    %v70 = vld [vmem:[%s3 + $0x2c] sm:$0xf]
    %v71 = vld [vmem:[%s3 + $0x30] sm:$0xf]
    %v72 = vld [vmem:[%s3 + $0x34] sm:$0xf]
    %v73 = vld [vmem:[%s3 + $0x38] sm:$0xf]
    %v74 = vld [vmem:[%s3 + $0x3c] sm:$0xf]
    %v91 = vunpack.c.l.b16 %v59
    %v92 = vunpack.c.l.b16 %v60
    %v93 = vunpack.c.l.b16 %v61
    %v94 = vunpack.c.l.b16 %v62
    %v95 = vunpack.c.l.b16 %v63
    %v96 = vunpack.c.l.b16 %v64
    %v97 = vunpack.c.l.b16 %v65
    %v98 = vunpack.c.l.b16 %v66
    %v99 = vunpack.c.l.b16 %v67
    %v100 = vunpack.c.l.b16 %v68
    %v101 = vunpack.c.l.b16 %v69
    %v102 = vunpack.c.l.b16 %v70
    %v103 = vunpack.c.l.b16 %v71
    %v104 = vunpack.c.l.b16 %v72
    %v105 = vunpack.c.l.b16 %v73
    %v106 = vunpack.c.l.b16 %v74
    %v107 = vpack.c.b16 %v92, %v91
    %v108 = vpack.c.b16 %v94, %v93
    %v109 = vpack.c.b16 %v96, %v95
    %v110 = vpack.c.b16 %v98, %v97
    %v111 = vpack.c.b16 %v100, %v99
    %v112 = vpack.c.b16 %v102, %v101
    %v113 = vpack.c.b16 %v104, %v103
    %v114 = vpack.c.b16 %v106, %v105
    %123 = vmatprep.subr.bf16.mxu0 0
    %124 = vmatpush1.bf16.msra.mxu0 %v107
    %125 = vmatprep.subr.bf16.mxu0 0
    %126 = vmatpush1.bf16.msra.mxu0 %v108
    %127 = vmatprep.subr.bf16.mxu0 0
    %128 = vmatpush1.bf16.msra.mxu0 %v109
    %129 = vmatprep.subr.bf16.mxu0 0
    %130 = vmatpush1.bf16.msra.mxu0 %v110
    %131 = vmatprep.subr.bf16.mxu0 0
    %132 = vmatpush1.bf16.msra.mxu0 %v111
    %133 = vmatprep.subr.bf16.mxu0 0
    %134 = vmatpush1.bf16.msra.mxu0 %v112
    %135 = vmatprep.subr.bf16.mxu0 0
    %136 = vmatpush1.bf16.msra.mxu0 %v113
    %137 = vmatprep.subr.bf16.mxu0 0
    %138 = vmatpush1.bf16.msra.mxu0 %v114
    %139 = vmatprep.subr.bf16.mxu0 0
    %140 = vmatpush1.bf16.msra.mxu0 0
    %141 = vmatprep.subr.bf16.mxu0 0
    %142 = vmatpush1.bf16.msra.mxu0 0
    %143 = vmatprep.subr.bf16.mxu0 0
    %144 = vmatpush1.bf16.msra.mxu0 0
    %145 = vmatprep.subr.bf16.mxu0 0
    %146 = vmatpush1.bf16.msra.mxu0 0
    %147 = vmatprep.subr.bf16.mxu0 0
    %148 = vmatpush1.bf16.msra.mxu0 0
    %149 = vmatprep.subr.bf16.mxu0 0
    %150 = vmatpush1.bf16.msra.mxu0 0
    %151 = vmatprep.subr.bf16.mxu0 0
    %152 = vmatpush1.bf16.msra.mxu0 0
    %153 = vmatprep.subr.bf16.mxu0 0
    %154 = vmatpush1.bf16.msra.mxu0 0
    %155 = vmatprep.mubr.bf16.mxu0 0
    %156 = vmatmul.mubr.bf16.gmra.mrb[0].mxu0 %v58
    %v157 = vpop.f32.mrb[0].mxu0
    %v158 = vadd.f32 0.0, %v157
    %v159 = vpop.f32.mrb[0].mxu0
    %v160 = vpop.f32.mrb[0].mxu0
    %v161 = vadd.f32 0.0, %v160
    %v162 = vpop.f32.mrb[0].mxu0
    %163 = vdwg.mxu0
    %v165 = vlaneseq
    %v166 = vshrl.u32 %v165, 7
    %v167 = vsub.s32 0, %v166
    %v168 = vrot.slane %v56, %v167
    %v170 = vadd.f32 %v158, %v168
    %vm171 = vcmp.ge.f32.partialorder %v170, 0.0
    %v172 = vstv %s46
    %v173 = vmul.f32 %v172, %v170
    %v174 = vsel %vm171, %v170, %v173
    %v175 = vlaneseq
    %v176 = vand.u32 %v175, 127
    %vm177 = vcmp.ge.s32.totalorder %v176, 16
    %v178 = vsel %vm177, %v158, 0.0
    %v179 = vsel %vm177, %v161, 0.0
    %181 = vset.pattern.permute.xlu0 0
    %182 = vperm.xlu0 %181, %v54
    %v183 = vpop.permute.xlu0 %182
    %186 = vset.pattern.permute.xlu0 0
    %187 = vperm.xlu0 %186, %v55
    %v188 = vpop.permute.xlu0 %187
    %v190 = vmul.f32 %v183, %v178
    %v191 = vmul.f32 %v188, %v179
    %192 = vset.pattern.permute.xlu0 1
    %193 = vperm.xlu0 %192, %v54
    %v194 = vpop.permute.xlu0 %193
    %196 = vset.pattern.permute.xlu0 1
    %197 = vperm.xlu0 %196, %v55
    %v198 = vpop.permute.xlu0 %197
    %v200 = vmul.f32 %v194, %v178
    %v201 = vmul.f32 %v198, %v179
    %204 = vrot.lane.b32.xlu0 %v200, 112
    %v205 = vpop.permute.xlu0 %204
    %206 = vrot.lane.b32.xlu0 %v201, 112
    %v207 = vpop.permute.xlu0 %206
    %v210 = vadd.f32 %v190, %v205
    %v211 = vadd.f32 %v191, %v207
    %212 = vset.pattern.permute.xlu0 2
    %213 = vperm.xlu0 %212, %v54
    %v214 = vpop.permute.xlu0 %213
    %216 = vset.pattern.permute.xlu0 2
    %217 = vperm.xlu0 %216, %v55
    %v218 = vpop.permute.xlu0 %217
    %v220 = vmul.f32 %v214, %v178
    %v221 = vmul.f32 %v218, %v179
    %224 = vrot.lane.b32.xlu0 %v220, 96
    %v225 = vpop.permute.xlu0 %224
    %226 = vrot.lane.b32.xlu0 %v221, 96
    %v227 = vpop.permute.xlu0 %226
    %v230 = vadd.f32 %v210, %v225
    %v231 = vadd.f32 %v211, %v227
    %232 = vset.pattern.permute.xlu0 3
    %233 = vperm.xlu0 %232, %v54
    %v234 = vpop.permute.xlu0 %233
    %236 = vset.pattern.permute.xlu0 3
    %237 = vperm.xlu0 %236, %v55
    %v238 = vpop.permute.xlu0 %237
    %v240 = vmul.f32 %v234, %v178
    %v241 = vmul.f32 %v238, %v179
    %244 = vrot.lane.b32.xlu0 %v240, 80
    %v245 = vpop.permute.xlu0 %244
    %246 = vrot.lane.b32.xlu0 %v241, 80
    %v247 = vpop.permute.xlu0 %246
    %v250 = vadd.f32 %v230, %v245
    %v251 = vadd.f32 %v231, %v247
    %252 = vset.pattern.permute.xlu0 4
    %253 = vperm.xlu0 %252, %v54
    %v254 = vpop.permute.xlu0 %253
    %256 = vset.pattern.permute.xlu0 4
    %257 = vperm.xlu0 %256, %v55
    %v258 = vpop.permute.xlu0 %257
    %v260 = vmul.f32 %v254, %v178
    %v261 = vmul.f32 %v258, %v179
    %262 = vset.pattern.permute.xlu0 5
    %263 = vperm.xlu0 %262, %v54
    %v264 = vpop.permute.xlu0 %263
    %266 = vset.pattern.permute.xlu0 5
    %267 = vperm.xlu0 %266, %v55
    %v268 = vpop.permute.xlu0 %267
    %v270 = vmul.f32 %v264, %v178
    %v271 = vmul.f32 %v268, %v179
    %274 = vrot.lane.b32.xlu0 %v270, 112
    %v275 = vpop.permute.xlu0 %274
    %276 = vrot.lane.b32.xlu0 %v271, 112
    %v277 = vpop.permute.xlu0 %276
    %v280 = vadd.f32 %v260, %v275
    %v281 = vadd.f32 %v261, %v277
    %282 = vset.pattern.permute.xlu0 6
    %283 = vperm.xlu0 %282, %v54
    %v284 = vpop.permute.xlu0 %283
    %286 = vset.pattern.permute.xlu0 6
    %287 = vperm.xlu0 %286, %v55
    %v288 = vpop.permute.xlu0 %287
    %v290 = vmul.f32 %v284, %v178
    %v291 = vmul.f32 %v288, %v179
    %294 = vrot.lane.b32.xlu0 %v290, 96
    %v295 = vpop.permute.xlu0 %294
    %296 = vrot.lane.b32.xlu0 %v291, 96
    %v297 = vpop.permute.xlu0 %296
    %v300 = vadd.f32 %v280, %v295
    %v301 = vadd.f32 %v281, %v297
    %302 = vset.pattern.permute.xlu0 7
    %303 = vperm.xlu0 %302, %v54
    %v304 = vpop.permute.xlu0 %303
    %306 = vset.pattern.permute.xlu0 7
    %307 = vperm.xlu0 %306, %v55
    %v308 = vpop.permute.xlu0 %307
    %v310 = vmul.f32 %v304, %v178
    %v311 = vmul.f32 %v308, %v179
    %314 = vrot.lane.b32.xlu0 %v310, 80
    %v315 = vpop.permute.xlu0 %314
    %316 = vrot.lane.b32.xlu0 %v311, 80
    %v317 = vpop.permute.xlu0 %316
    %v320 = vadd.f32 %v300, %v315
    %v321 = vadd.f32 %v301, %v317
    %322 = vset.pattern.permute.xlu0 8
    %323 = vperm.xlu0 %322, %v54
    %v324 = vpop.permute.xlu0 %323
    %326 = vset.pattern.permute.xlu0 8
    %327 = vperm.xlu0 %326, %v55
    %v328 = vpop.permute.xlu0 %327
    %v330 = vmul.f32 %v324, %v178
    %v331 = vmul.f32 %v328, %v179
    %332 = vset.pattern.permute.xlu0 9
    %333 = vperm.xlu0 %332, %v54
    %v334 = vpop.permute.xlu0 %333
    %336 = vset.pattern.permute.xlu0 9
    %337 = vperm.xlu0 %336, %v55
    %v338 = vpop.permute.xlu0 %337
    %v340 = vmul.f32 %v334, %v178
    %v341 = vmul.f32 %v338, %v179
    %344 = vrot.lane.b32.xlu0 %v340, 112
    %v345 = vpop.permute.xlu0 %344
    %346 = vrot.lane.b32.xlu0 %v341, 112
    %v347 = vpop.permute.xlu0 %346
    %v350 = vadd.f32 %v330, %v345
    %v351 = vadd.f32 %v331, %v347
    %352 = vset.pattern.permute.xlu0 10
    %353 = vperm.xlu0 %352, %v54
    %v354 = vpop.permute.xlu0 %353
    %356 = vset.pattern.permute.xlu0 10
    %357 = vperm.xlu0 %356, %v55
    %v358 = vpop.permute.xlu0 %357
    %v360 = vmul.f32 %v354, %v178
    %v361 = vmul.f32 %v358, %v179
    %364 = vrot.lane.b32.xlu0 %v360, 96
    %v365 = vpop.permute.xlu0 %364
    %366 = vrot.lane.b32.xlu0 %v361, 96
    %v367 = vpop.permute.xlu0 %366
    %v370 = vadd.f32 %v350, %v365
    %v371 = vadd.f32 %v351, %v367
    %372 = vset.pattern.permute.xlu0 11
    %373 = vperm.xlu0 %372, %v54
    %v374 = vpop.permute.xlu0 %373
    %376 = vset.pattern.permute.xlu0 11
    %377 = vperm.xlu0 %376, %v55
    %v378 = vpop.permute.xlu0 %377
    %v380 = vmul.f32 %v374, %v178
    %v381 = vmul.f32 %v378, %v179
    %384 = vrot.lane.b32.xlu0 %v380, 80
    %v385 = vpop.permute.xlu0 %384
    %386 = vrot.lane.b32.xlu0 %v381, 80
    %v387 = vpop.permute.xlu0 %386
    %v390 = vadd.f32 %v370, %v385
    %v391 = vadd.f32 %v371, %v387
    %392 = vset.pattern.permute.xlu0 12
    %393 = vperm.xlu0 %392, %v54
    %v394 = vpop.permute.xlu0 %393
    %396 = vset.pattern.permute.xlu0 12
    %397 = vperm.xlu0 %396, %v55
    %v398 = vpop.permute.xlu0 %397
    %v400 = vmul.f32 %v394, %v178
    %v401 = vmul.f32 %v398, %v179
    %402 = vset.pattern.permute.xlu0 13
    %403 = vperm.xlu0 %402, %v54
    %v404 = vpop.permute.xlu0 %403
    %406 = vset.pattern.permute.xlu0 13
    %407 = vperm.xlu0 %406, %v55
    %v408 = vpop.permute.xlu0 %407
    %v410 = vmul.f32 %v404, %v178
    %v411 = vmul.f32 %v408, %v179
    %414 = vrot.lane.b32.xlu0 %v410, 112
    %v415 = vpop.permute.xlu0 %414
    %416 = vrot.lane.b32.xlu0 %v411, 112
    %v417 = vpop.permute.xlu0 %416
    %v420 = vadd.f32 %v400, %v415
    %v421 = vadd.f32 %v401, %v417
    %422 = vset.pattern.permute.xlu0 14
    %423 = vperm.xlu0 %422, %v54
    %v424 = vpop.permute.xlu0 %423
    %426 = vset.pattern.permute.xlu0 14
    %427 = vperm.xlu0 %426, %v55
    %v428 = vpop.permute.xlu0 %427
    %v430 = vmul.f32 %v424, %v178
    %v431 = vmul.f32 %v428, %v179
    %434 = vrot.lane.b32.xlu0 %v430, 96
    %v435 = vpop.permute.xlu0 %434
    %436 = vrot.lane.b32.xlu0 %v431, 96
    %v437 = vpop.permute.xlu0 %436
    %v440 = vadd.f32 %v420, %v435
    %v441 = vadd.f32 %v421, %v437
    %442 = vset.pattern.permute.xlu0 15
    %443 = vperm.xlu0 %442, %v54
    %v444 = vpop.permute.xlu0 %443
    %446 = vset.pattern.permute.xlu0 15
    %447 = vperm.xlu0 %446, %v55
    %v448 = vpop.permute.xlu0 %447
    %v450 = vmul.f32 %v444, %v178
    %v451 = vmul.f32 %v448, %v179
    %454 = vrot.lane.b32.xlu0 %v450, 80
    %v455 = vpop.permute.xlu0 %454
    %456 = vrot.lane.b32.xlu0 %v451, 80
    %v457 = vpop.permute.xlu0 %456
    %v460 = vadd.f32 %v440, %v455
    %v461 = vadd.f32 %v441, %v457
    %464 = vrot.lane.b32.xlu0 %v320, 16
    %v465 = vpop.permute.xlu0 %464
    %466 = vrot.lane.b32.xlu0 %v321, 16
    %v467 = vpop.permute.xlu0 %466
    %472 = vrot.lane.b32.xlu0 %v390, 32
    %v473 = vpop.permute.xlu0 %472
    %474 = vrot.lane.b32.xlu0 %v391, 32
    %v475 = vpop.permute.xlu0 %474
    %480 = vrot.lane.b32.xlu0 %v460, 48
    %v481 = vpop.permute.xlu0 %480
    %482 = vrot.lane.b32.xlu0 %v461, 48
    %v483 = vpop.permute.xlu0 %482
    %vm486 = vcmask 130048
    %v487 = vsel %vm486, %v250, %v465
    %v488 = vsel %vm486, %v251, %v467
    %vm489 = vcmask 261120
    %v490 = vsel %vm489, %v487, %v473
    %v491 = vsel %vm489, %v488, %v475
    %vm492 = vcmask 392192
    %v493 = vsel %vm492, %v490, %v481
    %v494 = vsel %vm492, %v491, %v483
    %v495 = vadd.f32 %v493, %v168
    %v496 = vadd.f32 %v494, %v168
    %vm497 = vcmp.ge.f32.partialorder %v495, 0.0
    %vm498 = vcmp.ge.f32.partialorder %v496, 0.0
    %v499 = vmul.f32 %v172, %v495
    %v500 = vmul.f32 %v172, %v496
    %v501 = vsel %vm497, %v495, %v499
    %v502 = vsel %vm498, %v496, %v500
    %504 = vrot.lane.b32.xlu0 %v501, 112
    %v505 = vpop.permute.xlu0 %504
    %v507 = vadd.f32 %v501, %v505
    %508 = vrot.lane.b32.xlu0 %v501, 96
    %v509 = vpop.permute.xlu0 %508
    %v511 = vadd.f32 %v507, %v509
    %512 = vrot.lane.b32.xlu0 %v501, 80
    %v513 = vpop.permute.xlu0 %512
    %v515 = vadd.f32 %v511, %v513
    %v516 = vmul.f32 %v515, 0.25
    %v517 = vpack.c.bf16 %v502, %v502
    %v518 = vld [vmem:[%s5] sm:$0xf]
    %v519 = vld [vmem:[%s5 + $0x4] sm:$0xf]
    %v520 = vld [vmem:[%s5 + $0x8] sm:$0xf]
    %v521 = vld [vmem:[%s5 + $0xc] sm:$0xf]
    %v522 = vld [vmem:[%s5 + $0x10] sm:$0xf]
    %v523 = vld [vmem:[%s5 + $0x14] sm:$0xf]
    %v524 = vld [vmem:[%s5 + $0x18] sm:$0xf]
    %v525 = vld [vmem:[%s5 + $0x1c] sm:$0xf]
    %v534 = vunpack.c.l.b16 %v518
    %v535 = vunpack.c.l.b16 %v519
    %v536 = vunpack.c.l.b16 %v520
    %v537 = vunpack.c.l.b16 %v521
    %v538 = vunpack.c.l.b16 %v522
    %v539 = vunpack.c.l.b16 %v523
    %v540 = vunpack.c.l.b16 %v524
    %v541 = vunpack.c.l.b16 %v525
    %v542 = vpack.c.b16 %v535, %v534
    %v543 = vpack.c.b16 %v537, %v536
    %v544 = vpack.c.b16 %v539, %v538
    %v545 = vpack.c.b16 %v541, %v540
    %vm550 = vcmask 523264
    %v552 = vsel %vm550, %v517, 0
    %554 = vmatprep.subr.bf16.mxu0 0
    %555 = vmatpush1.bf16.msra.mxu0 %v542
    %556 = vmatprep.subr.bf16.mxu0 0
    %557 = vmatpush1.bf16.msra.mxu0 %v543
    %558 = vmatprep.subr.bf16.mxu0 0
    %559 = vmatpush1.bf16.msra.mxu0 %v544
    %560 = vmatprep.subr.bf16.mxu0 0
    %561 = vmatpush1.bf16.msra.mxu0 %v545
    %562 = vmatprep.subr.bf16.mxu0 0
    %563 = vmatpush1.bf16.msra.mxu0 0
    %564 = vmatprep.subr.bf16.mxu0 0
    %565 = vmatpush1.bf16.msra.mxu0 0
    %566 = vmatprep.subr.bf16.mxu0 0
    %567 = vmatpush1.bf16.msra.mxu0 0
    %568 = vmatprep.subr.bf16.mxu0 0
    %569 = vmatpush1.bf16.msra.mxu0 0
    %570 = vmatprep.subr.bf16.mxu0 0
    %571 = vmatpush1.bf16.msra.mxu0 0
    %572 = vmatprep.subr.bf16.mxu0 0
    %573 = vmatpush1.bf16.msra.mxu0 0
    %574 = vmatprep.subr.bf16.mxu0 0
    %575 = vmatpush1.bf16.msra.mxu0 0
    %576 = vmatprep.subr.bf16.mxu0 0
    %577 = vmatpush1.bf16.msra.mxu0 0
    %578 = vmatprep.subr.bf16.mxu0 0
    %579 = vmatpush1.bf16.msra.mxu0 0
    %580 = vmatprep.subr.bf16.mxu0 0
    %581 = vmatpush1.bf16.msra.mxu0 0
    %582 = vmatprep.subr.bf16.mxu0 0
    %583 = vmatpush1.bf16.msra.mxu0 0
    %584 = vmatprep.subr.bf16.mxu0 0
    %585 = vmatpush1.bf16.msra.mxu0 0
    %586 = vmatprep.mubr.bf16.mxu0 0
    %587 = vmatmul.mubr.bf16.gmra.mrb[0].mxu0 %v552
    %v588 = vpop.f32.mrb[0].mxu0
    %v589 = vadd.f32 0.0, %v588
    %v590 = vpop.f32.mrb[0].mxu0
    %v591 = vpop.f32.mrb[0].mxu0
    %v592 = vpop.f32.mrb[0].mxu0
    %593 = vdwg.mxu0
    %v594 = vmul.f32 %v188, %v589
    %v595 = vmul.f32 %v198, %v589
    %597 = vrot.lane.b32.xlu0 %v595, 96
    %v598 = vpop.permute.xlu0 %597
    %v600 = vadd.f32 %v594, %v598
    %v601 = vmul.f32 %v218, %v589
    %603 = vrot.lane.b32.xlu0 %v601, 64
    %v604 = vpop.permute.xlu0 %603
    %v606 = vadd.f32 %v600, %v604
    %v607 = vmul.f32 %v238, %v589
    %609 = vrot.lane.b32.xlu0 %v607, 32
    %v610 = vpop.permute.xlu0 %609
    %v612 = vadd.f32 %v606, %v610
    %v613 = vmul.f32 %v258, %v589
    %v614 = vmul.f32 %v268, %v589
    %616 = vrot.lane.b32.xlu0 %v614, 96
    %v617 = vpop.permute.xlu0 %616
    %v619 = vadd.f32 %v613, %v617
    %v620 = vmul.f32 %v288, %v589
    %622 = vrot.lane.b32.xlu0 %v620, 64
    %v623 = vpop.permute.xlu0 %622
    %v625 = vadd.f32 %v619, %v623
    %v626 = vmul.f32 %v308, %v589
    %628 = vrot.lane.b32.xlu0 %v626, 32
    %v629 = vpop.permute.xlu0 %628
    %v631 = vadd.f32 %v625, %v629
    %v632 = vmul.f32 %v328, %v589
    %v633 = vmul.f32 %v338, %v589
    %635 = vrot.lane.b32.xlu0 %v633, 96
    %v636 = vpop.permute.xlu0 %635
    %v638 = vadd.f32 %v632, %v636
    %v639 = vmul.f32 %v358, %v589
    %641 = vrot.lane.b32.xlu0 %v639, 64
    %v642 = vpop.permute.xlu0 %641
    %v644 = vadd.f32 %v638, %v642
    %v645 = vmul.f32 %v378, %v589
    %647 = vrot.lane.b32.xlu0 %v645, 32
    %v648 = vpop.permute.xlu0 %647
    %v650 = vadd.f32 %v644, %v648
    %v651 = vmul.f32 %v398, %v589
    %v652 = vmul.f32 %v408, %v589
    %654 = vrot.lane.b32.xlu0 %v652, 96
    %v655 = vpop.permute.xlu0 %654
    %v657 = vadd.f32 %v651, %v655
    %v658 = vmul.f32 %v428, %v589
    %660 = vrot.lane.b32.xlu0 %v658, 64
    %v661 = vpop.permute.xlu0 %660
    %v663 = vadd.f32 %v657, %v661
    %v664 = vmul.f32 %v448, %v589
    %666 = vrot.lane.b32.xlu0 %v664, 32
    %v667 = vpop.permute.xlu0 %666
    %v669 = vadd.f32 %v663, %v667
    %671 = vrot.lane.b32.xlu0 %v631, 32
    %v672 = vpop.permute.xlu0 %671
    %675 = vrot.lane.b32.xlu0 %v650, 64
    %v676 = vpop.permute.xlu0 %675
    %679 = vrot.lane.b32.xlu0 %v669, 96
    %v680 = vpop.permute.xlu0 %679
    %v682 = vsel %vm489, %v612, %v672
    %v683 = vsel %vm550, %v682, %v676
    %vm684 = vcmask 785408
    %v685 = vsel %vm684, %v683, %v680
    %v687 = vlaneseq
    %v688 = vshrl.u32 %v687, 7
    %v689 = vsub.s32 0, %v688
    %v690 = vrot.slane %v57, %v689
    %v692 = vadd.f32 %v685, %v690
    %vm693 = vcmp.ge.f32.partialorder %v692, 0.0
    %v694 = vstv %s47
    %v695 = vmul.f32 %v694, %v692
    %v696 = vsel %vm693, %v692, %v695
    %v697 = vsub.f32 %v696, %v53
    %v699 = vrot.slane %v53, 4
    %v701 = vsub.f32 %v696, %v699
    %v702 = vpack.c.bf16 %v174, %v174
    %v703 = vld [vmem:[%s7] sm:$0xf]
    %v704 = vld [vmem:[%s7 + $0x4] sm:$0xf]
    %v706 = vrot.slane %v702, 2
    %v709 = vunpack.c.l.b16 %v703
    %v710 = vunpack.c.l.b16 %v704
    %v711 = vpack.c.b16 %v710, %v709
    %v714 = vsel %vm486, %v706, 0
    %716 = vmatprep.subr.bf16.mxu0 0
    %717 = vmatpush1.bf16.msra.mxu0 %v711
    %718 = vmatprep.subr.bf16.mxu0 0
    %719 = vmatpush1.bf16.msra.mxu0 0
    %720 = vmatprep.subr.bf16.mxu0 0
    %721 = vmatpush1.bf16.msra.mxu0 0
    %722 = vmatprep.subr.bf16.mxu0 0
    %723 = vmatpush1.bf16.msra.mxu0 0
    %724 = vmatprep.subr.bf16.mxu0 0
    %725 = vmatpush1.bf16.msra.mxu0 0
    %726 = vmatprep.subr.bf16.mxu0 0
    %727 = vmatpush1.bf16.msra.mxu0 0
    %728 = vmatprep.subr.bf16.mxu0 0
    %729 = vmatpush1.bf16.msra.mxu0 0
    %730 = vmatprep.subr.bf16.mxu0 0
    %731 = vmatpush1.bf16.msra.mxu0 0
    %732 = vmatprep.subr.bf16.mxu0 0
    %733 = vmatpush1.bf16.msra.mxu0 0
    %734 = vmatprep.subr.bf16.mxu0 0
    %735 = vmatpush1.bf16.msra.mxu0 0
    %736 = vmatprep.subr.bf16.mxu0 0
    %737 = vmatpush1.bf16.msra.mxu0 0
    %738 = vmatprep.subr.bf16.mxu0 0
    %739 = vmatpush1.bf16.msra.mxu0 0
    %740 = vmatprep.subr.bf16.mxu0 0
    %741 = vmatpush1.bf16.msra.mxu0 0
    %742 = vmatprep.subr.bf16.mxu0 0
    %743 = vmatpush1.bf16.msra.mxu0 0
    %744 = vmatprep.subr.bf16.mxu0 0
    %745 = vmatpush1.bf16.msra.mxu0 0
    %746 = vmatprep.subr.bf16.mxu0 0
    %747 = vmatpush1.bf16.msra.mxu0 0
    %748 = vmatprep.mubr.bf16.mxu0 0
    %749 = vmatmul.mubr.bf16.gmra.mrb[0].mxu0 %v714
    %v750 = vpop.f32.mrb[0].mxu0
    %v751 = vadd.f32 0.0, %v750
    %v752 = vpop.f32.mrb[0].mxu0
    %v753 = vpop.f32.mrb[0].mxu0
    %v754 = vpop.f32.mrb[0].mxu0
    %755 = vdwg.mxu0
    %v756 = vld [vmem:[%s8] sm:$0xf]
    %v757 = vld [vmem:[%s8 + $0x4] sm:$0xf]
    %v760 = vunpack.c.l.b16 %v756
    %v761 = vunpack.c.l.b16 %v757
    %v762 = vpack.c.b16 %v761, %v760
    %v765 = vsel %vm486, %v702, 0
    %767 = vmatprep.subr.bf16.mxu0 0
    %768 = vmatpush1.bf16.msra.mxu0 %v762
    %769 = vmatprep.subr.bf16.mxu0 0
    %770 = vmatpush1.bf16.msra.mxu0 0
    %771 = vmatprep.subr.bf16.mxu0 0
    %772 = vmatpush1.bf16.msra.mxu0 0
    %773 = vmatprep.subr.bf16.mxu0 0
    %774 = vmatpush1.bf16.msra.mxu0 0
    %775 = vmatprep.subr.bf16.mxu0 0
    %776 = vmatpush1.bf16.msra.mxu0 0
    %777 = vmatprep.subr.bf16.mxu0 0
    %778 = vmatpush1.bf16.msra.mxu0 0
    %779 = vmatprep.subr.bf16.mxu0 0
    %780 = vmatpush1.bf16.msra.mxu0 0
    %781 = vmatprep.subr.bf16.mxu0 0
    %782 = vmatpush1.bf16.msra.mxu0 0
    %783 = vmatprep.subr.bf16.mxu0 0
    %784 = vmatpush1.bf16.msra.mxu0 0
    %785 = vmatprep.subr.bf16.mxu0 0
    %786 = vmatpush1.bf16.msra.mxu0 0
    %787 = vmatprep.subr.bf16.mxu0 0
    %788 = vmatpush1.bf16.msra.mxu0 0
    %789 = vmatprep.subr.bf16.mxu0 0
    %790 = vmatpush1.bf16.msra.mxu0 0
    %791 = vmatprep.subr.bf16.mxu0 0
    %792 = vmatpush1.bf16.msra.mxu0 0
    %793 = vmatprep.subr.bf16.mxu0 0
    %794 = vmatpush1.bf16.msra.mxu0 0
    %795 = vmatprep.subr.bf16.mxu0 0
    %796 = vmatpush1.bf16.msra.mxu0 0
    %797 = vmatprep.subr.bf16.mxu0 0
    %798 = vmatpush1.bf16.msra.mxu0 0
    %799 = vmatprep.mubr.bf16.mxu0 0
    %800 = vmatmul.mubr.bf16.gmra.mrb[0].mxu0 %v765
    %v801 = vpop.f32.mrb[0].mxu0
    %v802 = vadd.f32 0.0, %v801
    %v803 = vpop.f32.mrb[0].mxu0
    %v804 = vpop.f32.mrb[0].mxu0
    %v805 = vpop.f32.mrb[0].mxu0
    %806 = vdwg.mxu0
    %v808 = vrot.slane %v516, 3
    %v810 = vrot.slane %v516, 7
    %vm812 = vcmask 1040384
    %v813 = vsel %vm812, %v808, %v810
    %v814 = vsel %vm812, %v810, %v808
    %v815 = vmul.f32 %v751, %v516
    %vm816 = vcmask 125952
    %v817 = vsel %vm816, %v815, 0.0
    %818 = vadd.xlane.f32.xlu0 %v817
    %v819 = vpop.xlane.xlu0 %818
    %v820 = vstv %s48
    %v821 = vadd.f32 %v819, %v820
    %v822 = vrot.slane %v516, 4
    %v824 = vmul.f32 %v802, %v822
    %v825 = vsel %vm816, %v824, 0.0
    %826 = vadd.xlane.f32.xlu0 %v825
    %v827 = vpop.xlane.xlu0 %826
    %v828 = vstv %s49
    %v829 = vadd.f32 %v827, %v828
    %v830 = vmul.f32 %v751, %v813
    %v831 = vsel %vm816, %v830, 0.0
    %832 = vadd.xlane.f32.xlu0 %v831
    %v833 = vpop.xlane.xlu0 %832
    %v834 = vadd.f32 %v833, %v820
    %v835 = vmul.f32 %v802, %v814
    %v836 = vsel %vm816, %v835, 0.0
    %837 = vadd.xlane.f32.xlu0 %v836
    %v838 = vpop.xlane.xlu0 %837
    %v839 = vadd.f32 %v838, %v828
    %v840 = vadd.f32 %v821, %v829
    %v841 = vmul.f32 %v840, 0.5
    %v842 = vadd.f32 %v834, %v839
    %v843 = vmul.f32 %v842, 0.5
    %v844 = vsub.f32 0.0, %v841
    %v845 = vmax.f32 %v844, 0.0
    %vm846 = vcmp.ne.f32.partialorder %v844, %v844
    %v847 = vadd.f32 %v844, 0.0
    %v848 = vand.u32 2147483647, %v844
    %v849 = vsub.f32 0.0, %v848
    %v850 = vmul.f32 %v849, 1.442695
    %v851 = vpow.pop %v850
    %v852 = vadd.f32 %v851, 1.0
    %v853 = vlog2.pop %v852
    %v854 = vmul.f32 %v853, 0.6931472
    %v855 = vmul.f32 -0.5, %v851
    %v856 = vadd.f32 %v855, 1.0
    %v857 = vmul.f32 %v856, %v851
    %v858 = vand.u32 2147483647, %v851
    %vm859 = vcmp.lt.f32.partialorder %v858, 0.0004427343
    %v860 = vsel %vm859, %v857, %v854
    %v861 = vadd.f32 %v845, %v860
    %v862 = vsel %vm846, %v847, %v861
    %v863 = vsub.f32 0.0, %v862
    %v864 = vsub.f32 0.0, %v863
    %v865 = vsub.f32 0.0, %v843
    %v866 = vsub.f32 0.0, %v865
    %v867 = vmax.f32 %v866, 0.0
    %vm868 = vcmp.ne.f32.partialorder %v866, %v866
    %v869 = vadd.f32 %v866, 0.0
    %v870 = vand.u32 2147483647, %v866
    %v871 = vsub.f32 0.0, %v870
    %v872 = vmul.f32 %v871, 1.442695
    %v873 = vpow.pop %v872
    %v874 = vadd.f32 %v873, 1.0
    %v875 = vlog2.pop %v874
    %v876 = vmul.f32 %v875, 0.6931472
    %v877 = vmul.f32 -0.5, %v873
    %v878 = vadd.f32 %v877, 1.0
    %v879 = vmul.f32 %v878, %v873
    %v880 = vand.u32 2147483647, %v873
    %vm881 = vcmp.lt.f32.partialorder %v880, 0.0004427343
    %v882 = vsel %vm881, %v879, %v876
    %v883 = vadd.f32 %v867, %v882
    %v884 = vsel %vm868, %v869, %v883
    %v885 = vsub.f32 0.0, %v884
    %v886 = vsub.f32 0.0, %v885
    %vm887 = vcmask 3072
    %v888 = vsel %vm887, %v864, 0.0
    %889 = vadd.xlane.f32.xlu0 %v888
    %v890 = vpop.xlane.xlu0 %889
    %v891 = vrot.slane %v890, 4
    %v892 = vadd.f32 %v890, %v891
    %v893 = vrot.slane %v892, 2
    %v894 = vadd.f32 %v892, %v893
    %v895 = vrot.slane %v894, 1
    %v896 = vadd.f32 %v894, %v895
    %s897 = vtos %v896
    %v898 = vstv %s897
    %v899 = vsel %vm887, %v886, 0.0
    %900 = vadd.xlane.f32.xlu0 %v899
    %v901 = vpop.xlane.xlu0 %900
    %v902 = vrot.slane %v901, 4
    %v903 = vadd.f32 %v901, %v902
    %v904 = vrot.slane %v903, 2
    %v905 = vadd.f32 %v903, %v904
    %v906 = vrot.slane %v905, 1
    %v907 = vadd.f32 %v905, %v906
    %s908 = vtos %v907
    %v909 = vstv %s908
    %v910 = vadd.f32 %v898, %v909
    %v911 = vrcp.pop 8.0
    %v912 = vmul.f32 %v910, %v911
    %v913 = vmul.f32 %v697, %v697
    %vm914 = vcmask 257024
    %v915 = vsel %vm914, %v913, 0.0
    %916 = vadd.xlane.f32.xlu0 %v915
    %v917 = vpop.xlane.xlu0 %916
    %v918 = vrot.slane %v917, 4
    %v919 = vadd.f32 %v917, %v918
    %v920 = vrot.slane %v919, 2
    %v921 = vadd.f32 %v919, %v920
    %v922 = vrot.slane %v921, 1
    %v923 = vadd.f32 %v921, %v922
    %s924 = vtos %v923
    %v925 = vstv %s924
    %v926 = vrcp.pop 128.0
    %v927 = vmul.f32 %v925, %v926
    %v928 = vmul.f32 %v701, %v701
    %v930 = vrot.slane %v928, 4
    %v932 = vsel %vm914, %v930, 0.0
    %933 = vadd.xlane.f32.xlu0 %v932
    %v934 = vpop.xlane.xlu0 %933
    %v935 = vrot.slane %v934, 4
    %v936 = vadd.f32 %v934, %v935
    %v937 = vrot.slane %v936, 2
    %v938 = vadd.f32 %v936, %v937
    %v939 = vrot.slane %v938, 1
    %v940 = vadd.f32 %v938, %v939
    %s941 = vtos %v940
    %v942 = vstv %s941
    %v943 = vmul.f32 %v942, %v926
    %v944 = vadd.f32 %v927, %v943
    %v945 = vmul.f32 %v944, 0.5
    %v946 = vstv %s50
    %v947 = vmul.f32 %v946, %v912
    %v948 = vstv %s51
    %v949 = vmul.f32 %v948, %v945
    %v950 = vadd.f32 %v947, %v949
    %v951 = vxor.u32 %v843, 2147483648
    %v952 = vmul.f32 %v951, 1.442695
    %v953 = vpow.pop %v952
    %v954 = vadd.f32 %v953, 1.0
    %v955 = vrcp.pop %v954
    %v956 = vmul.f32 1.0, %v955
    %v957 = vxor.u32 %v841, 2147483648
    %v958 = vmul.f32 %v957, 1.442695
    %v959 = vpow.pop %v958
    %v960 = vadd.f32 %v959, 1.0
    %v961 = vrcp.pop %v960
    %v962 = vmul.f32 1.0, %v961
    %v963 = vsub.f32 %v956, %v962
    %v964 = vrsqrt.pop %v917
    %v965 = vmul.f32 %v917, %v964
    %vm966 = vcmp.eq.f32.partialorder %v917, inf
    %v967 = vsel %vm966, %v917, %v965
    %vm968 = vcmp.eq.f32.partialorder %v917, 0.0
    %v969 = vand.u32 %v917, 2147483648
    %v970 = vsel %vm968, %v969, %v967
    %vm971 = vcmask 261124
    %v972 = vsel %vm971, %v928, 0.0
    %973 = vadd.xlane.f32.xlu0 %v972
    %v974 = vpop.xlane.xlu0 %973
    %v975 = vrsqrt.pop %v974
    %v976 = vmul.f32 %v974, %v975
    %vm977 = vcmp.eq.f32.partialorder %v974, inf
    %v978 = vsel %vm977, %v974, %v976
    %vm979 = vcmp.eq.f32.partialorder %v974, 0.0
    %v980 = vand.u32 %v974, 2147483648
    %v981 = vsel %vm979, %v980, %v978
    %v983 = vrot.slane %v981, 4
    %v985 = vadd.f32 %v970, %v983
    %v986 = vmul.f32 %v985, 0.5
    %vm987 = vcmask 1043456
    %v988 = vsel %vm987, %v963, inf
    %v989 = vrot.slane %v988, 4
    %v990 = vmin.f32 %v988, %v989
    %v991 = vrot.slane %v990, 2
    %v992 = vmin.f32 %v990, %v991
    %v993 = vrot.slane %v992, 1
    %v994 = vmin.f32 %v992, %v993
    %s995 = vtos %v994
    %v996 = vstv %s995
    %v997 = vsel %vm987, %v963, -inf
    %v998 = vrot.slane %v997, 4
    %v999 = vmax.f32 %v997, %v998
    %v1000 = vrot.slane %v999, 2
    %v1001 = vmax.f32 %v999, %v1000
    %v1002 = vrot.slane %v1001, 1
    %v1003 = vmax.f32 %v1001, %v1002
    %s1004 = vtos %v1003
    %v1005 = vstv %s1004
    %v1006 = vsub.f32 %v1005, %v996
    %vm1007 = vcmp.eq.f32.partialorder %v1006, 0.0
    %v1008 = vsel %vm1007, 1.0, %v1006
    %v1009 = vsub.f32 %v963, %v996
    %v1010 = vrcp.pop %v1008
    %v1011 = vmul.f32 %v1009, %v1010
    %v1012 = vmul.f32 %v946, %v1011
    %v1013 = vsel %vm887, %v986, inf
    %1014 = vmin.xlane.f32.xlu0 %v1013
    %v1015 = vpop.xlane.xlu0 %1014
    %v1016 = vrot.slane %v1015, 4
    %v1017 = vmin.f32 %v1015, %v1016
    %v1018 = vrot.slane %v1017, 2
    %v1019 = vmin.f32 %v1017, %v1018
    %v1020 = vrot.slane %v1019, 1
    %v1021 = vmin.f32 %v1019, %v1020
    %s1022 = vtos %v1021
    %v1023 = vstv %s1022
    %v1024 = vsel %vm887, %v986, -inf
    %1025 = vmax.xlane.f32.xlu0 %v1024
    %v1026 = vpop.xlane.xlu0 %1025
    %v1027 = vrot.slane %v1026, 4
    %v1028 = vmax.f32 %v1026, %v1027
    %v1029 = vrot.slane %v1028, 2
    %v1030 = vmax.f32 %v1028, %v1029
    %v1031 = vrot.slane %v1030, 1
    %v1032 = vmax.f32 %v1030, %v1031
    %s1033 = vtos %v1032
    %v1034 = vstv %s1033
    %v1035 = vsub.f32 %v1034, %v1023
    %vm1036 = vcmp.eq.f32.partialorder %v1035, 0.0
    %v1037 = vsel %vm1036, 1.0, %v1035
    %v1038 = vsub.f32 %v986, %v1023
    %v1039 = vrcp.pop %v1037
    %v1040 = vmul.f32 %v1038, %v1039
    %v1041 = vmul.f32 %v948, %v1040
    %v1042 = vadd.f32 %v1012, %v1041
    %vm1043 = vcmask 7168
    %v1044 = vsel %vm1043, %v1042, %v950
    %vm1045 = vcmask 15360
    %v1046 = vsel %vm1045, %v1044, %v912
    %vm1047 = vcmask 23552
    %v1048 = vsel %vm1047, %v1046, %v945
    %vm1049 = vcmask 27648
    %1050 = vst.msk [vmem:[%s9] sm:$0xf] %vm1049, %v1048
    // Predicated region
    $region42: #{sl_gad_forward.1} parent=1 // pred_check
      _
    $region43: #{sl_gad_forward.1} parent=1 // pred_check_branch
      %1052 = sbr.rel (0) target = $region45
    $region44: #{sl_gad_forward.1} parent=1 // pred_region
      _
    $region45: #{sl_gad_forward.1} parent=1 // pred_fallthru
      _
    // Predicated region
    $region46: #{sl_gad_forward.1} parent=1 // pred_check
      _
    $region47: #{sl_gad_forward.1} parent=1 // pred_check_branch
      %1054 = sbr.rel (0) target = $region49
    $region48: #{sl_gad_forward.1} parent=1 // pred_region
      _
    $region49: #{sl_gad_forward.1} parent=1 // pred_fallthru
      _
    %1055 = vsyncpa [#allocation3], 1

</llo_original>
